<compile_context>
chip_gen: v6e
topology: v6e:2x2x1
jax: 0.10.0
libtpu: 0.0.40
codegen_flags: <defaults>
</compile_context>

<pallas_src>
import functools

import jax
import jax.numpy as jnp
import numpy as np
from jax.experimental import pallas as pl
from jax.experimental.pallas import tpu as pltpu


# ----------------------------------------------------------------------------
# Pallas kernel: all three AnchorFreeModule heads for one batch element.
# ----------------------------------------------------------------------------
def _fused_heads_kernel(x_ref, w1_ref, b1_ref, w2_ref, b2_ref, o_ref, col_ref):
    # x_ref:   (1, H+2, W+2, Cin)  bf16, spatially pre-padded input (pad=1)
    # w1_ref:  (9*Cin, M)          bf16, BN-folded 3x3 weights, tap-major rows
    #                              (M = 3 * Cmid : hm|wh|off side by side)
    # b1_ref:  (1, M)              f32,  BN-folded 3x3 bias
    # w2_ref:  (M, COUT_PAD)       bf16, block-diagonal 1x1 weights, lane-padded
    # b2_ref:  (1, COUT_PAD)       f32,  1x1 bias, lane-padded with zeros
    # o_ref:   (1, H*W, COUT_PAD)  f32,  lane-dense output slab
    # col_ref: (H*W, 9*Cin)        bf16, im2col scratch (VMEM)
    x = x_ref[0]                       # (H+2, W+2, Cin)
    hp2, wp2, cin = x.shape
    h, w = hp2 - 2, wp2 - 2

    # Build im2col once (pays the 9 slice/reshape relayouts a single time),
    # then do one K = 9*Cin matmul on the MXU for all three heads.
    for dy in range(3):
        for dx in range(3):
            t = dy * 3 + dx
            col_ref[:, t * cin:(t + 1) * cin] = (
                x[dy:dy + h, dx:dx + w, :].reshape(h * w, cin))

    acc = jnp.dot(col_ref[...], w1_ref[...],
                  preferred_element_type=jnp.float32)          # (H*W, M) f32
    acc = jnp.maximum(acc + b1_ref[...], 0.0)                  # bias + ReLU

    out = jnp.dot(acc.astype(w2_ref.dtype), w2_ref[...],
                  preferred_element_type=jnp.float32) + b2_ref[...]
    o_ref[0] = out.astype(o_ref.dtype)                         # full-lane store


def _run_fused_heads(x_pad, w1, b1, w2, b2):
    """x_pad: (B, H+2, W+2, Cin) bf16. Returns (B, H*W, COUT_PAD) f32."""
    b_, hp2, wp2, cin = x_pad.shape
    h, w = hp2 - 2, wp2 - 2
    k9, m = w1.shape
    cout_pad = w2.shape[1]

    full = lambda shape: pl.BlockSpec(shape, lambda i, _s=len(shape): (0,) * _s)

    grid_spec = pltpu.PrefetchScalarGridSpec(
        num_scalar_prefetch=0,
        grid=(b_,),
        in_specs=[
            pl.BlockSpec((1, hp2, wp2, cin), lambda i: (i, 0, 0, 0)),
            full((k9, m)),
            full((1, m)),
            full((m, cout_pad)),
            full((1, cout_pad)),
        ],
        out_specs=pl.BlockSpec((1, h * w, cout_pad), lambda i: (i, 0, 0)),
        scratch_shapes=[pltpu.VMEM((h * w, k9), jnp.bfloat16)],
    )
    # TODO(synk): for production-sized feature maps (large H*W*Cin), add a
    # row-strip grid dimension with a 2-row halo and raise vmem_limit_bytes on
    # v5e/v6e (budget ~64 MiB total on v7x); unnecessary at these test shapes.
    return pl.pallas_call(
        _fused_heads_kernel,
        out_shape=jax.ShapeDtypeStruct((b_, h * w, cout_pad), jnp.float32),
        grid_spec=grid_spec,
        compiler_params=pltpu.CompilerParams(
            dimension_semantics=("parallel",)),
    )(x_pad, w1, b1, w2, b2)


# ----------------------------------------------------------------------------
# Parameter construction (deterministic, mirrors the PyTorch __init__ shapes).
# ----------------------------------------------------------------------------
def make_head_params(key, cin, cout, eps=1e-5):
    cmid = cin // 2
    k = jax.random.split(key, 8)
    # nn.Conv2d(cin, cmid, 3): weight (cmid, cin, 3, 3), bias (cmid,)
    w1_t = jax.random.normal(k[0], (cmid, cin, 3, 3), jnp.float32) * 0.1
    b1 = jax.random.normal(k[1], (cmid,), jnp.float32) * 0.1
    # nn.BatchNorm2d(cmid): gamma, beta, running_mean, running_var
    gamma = 1.0 + 0.1 * jax.random.normal(k[2], (cmid,), jnp.float32)
    beta = 0.1 * jax.random.normal(k[3], (cmid,), jnp.float32)
    r_mean = 0.1 * jax.random.normal(k[4], (cmid,), jnp.float32)
    r_var = jnp.abs(1.0 + 0.1 * jax.random.normal(k[5], (cmid,), jnp.float32))
    # nn.Conv2d(cmid, cout, 1): weight (cout, cmid, 1, 1), bias (cout,)
    w2_t = jax.random.normal(k[6], (cout, cmid, 1, 1), jnp.float32) * 0.1
    b2 = jax.random.normal(k[7], (cout,), jnp.float32) * 0.1
    torch_params = (w1_t, b1, gamma, beta, r_mean, r_var, w2_t, b2)

    # Fold eval-mode BatchNorm into the 3x3 conv (exact up to FP reassociation).
    # TODO(synk): train-mode BatchNorm (batch statistics) is not modeled.
    scale = gamma / jnp.sqrt(r_var + eps)
    shift = beta - r_mean * scale
    w1_f = w1_t * scale[:, None, None, None]            # (cmid, cin, 3, 3)
    b1_f = b1 * scale + shift                           # (cmid,)
    # im2col layout: row index = (ky*3 + kx) * cin + ic, column = mid channel.
    w1_k = jnp.transpose(w1_f, (2, 3, 1, 0)).reshape(9 * cin, cmid)
    w2_k = jnp.transpose(w2_t[:, :, 0, 0], (1, 0))      # (cmid, cout)
    return (w1_k, b1_f, w2_k, b2), torch_params


# ----------------------------------------------------------------------------
# CenterNetHeadTea forward (three heads, one fused Pallas call).
# ----------------------------------------------------------------------------
class CenterNetHeadTeaPallas:
    HEAD_NAMES = ("hm", "wh", "off")

    def __init__(self, in_channels, down_ratio=8, start_index=6, num_hm_cls=3,
                 alpha=0.25, gamma=2.0, seed=0, eps=1e-5):
        self.cin = in_channels
        self.down_ratio = down_ratio
        self.start_index = start_index
        self.alpha = alpha
        self.gamma = gamma
        cmid = in_channels // 2
        self.couts = {"hm": num_hm_cls, "wh": 2, "off": 2}

        key = jax.random.PRNGKey(seed)
        keys = jax.random.split(key, 3)
        w1_list, b1_list, w2_list, b2_list = [], [], [], []
        self.torch_params = {}
        for name, k in zip(self.HEAD_NAMES, keys):
            (w1_k, b1_f, w2_k, b2), tp = make_head_params(
                k, in_channels, self.couts[name], eps)
            self.torch_params[name] = tp
            w1_list.append(w1_k)
            b1_list.append(b1_f)
            w2_list.append(w2_k)
            b2_list.append(b2)

        m = 3 * cmid                                       # fused mid width
        cout_total = sum(self.couts[n] for n in self.HEAD_NAMES)
        cout_pad = max(128, -(-cout_total // 128) * 128)   # lane-dense output

        # Fused 3x3 weights / bias (heads side by side along the mid axis).
        w1_all = jnp.concatenate(w1_list, axis=1)          # (9*cin, m)
        b1_all = jnp.concatenate(b1_list)[None, :]         # (1, m)
        # Block-diagonal, lane-padded 1x1 weights / bias.
        w2_all = jnp.zeros((m, cout_pad), jnp.float32)
        b2_all = jnp.zeros((cout_pad,), jnp.float32)
        self.slices = {}
        col = 0
        for idx, name in enumerate(self.HEAD_NAMES):
            co = self.couts[name]
            w2_all = w2_all.at[idx * cmid:(idx + 1) * cmid,
                               col:col + co].set(w2_list[idx])
            b2_all = b2_all.at[col:col + co].set(b2_list[idx])
            self.slices[name] = (col, col + co)
            col += co

        # bf16 MXU operands (f32 accumulation in-kernel); f32 biases / output.
        self.w1 = w1_all.astype(jnp.bfloat16)
        self.b1 = b1_all
        self.w2 = w2_all.astype(jnp.bfloat16)
        self.b2 = b2_all[None, :]
        self.cout_pad = cout_pad

    @functools.partial(jax.jit, static_argnums=0)
    def forward(self, features_nchw):
        # features_nchw: (B, Cin, H, W) -- same convention as the PyTorch module.
        b_, cin, h, w = features_nchw.shape
        x = jnp.transpose(features_nchw, (0, 2, 3, 1)).astype(jnp.bfloat16)
        # TODO(synk): for very large feature maps the 1-px halo pad could be
        # handled inside the kernel (masked border taps) to save this HBM pass.
        x_pad = jnp.pad(x, ((0, 0), (1, 1), (1, 1), (0, 0)))
        y = _run_fused_heads(x_pad, self.w1, self.b1, self.w2, self.b2)
        y = y.reshape(b_, h, w, self.cout_pad)             # lane-padded NHWC
        out = {}
        for name in self.HEAD_NAMES:
            lo, hi = self.slices[name]
            out[name] = jnp.transpose(y[..., lo:hi], (0, 3, 1, 2))  # NCHW
        return out


# ----------------------------------------------------------------------------
# Pure-JAX f32 reference of the exact PyTorch math (correctness check).
# ----------------------------------------------------------------------------
def _reference_head(x_nchw, torch_params, eps=1e-5):
    w1, b1, gamma, beta, r_mean, r_var, w2, b2 = torch_params
    y = jax.lax.conv_general_dilated(
        x_nchw, w1, window_strides=(1, 1), padding=((1, 1), (1, 1)),
        dimension_numbers=("NCHW", "OIHW", "NCHW"))
    y = y + b1[None, :, None, None]
    y = (y - r_mean[None, :, None, None]) / jnp.sqrt(
        r_var[None, :, None, None] + eps)
    y = y * gamma[None, :, None, None] + beta[None, :, None, None]
    y = jnp.maximum(y, 0.0)
    y = jax.lax.conv_general_dilated(
        y, w2, window_strides=(1, 1), padding=((0, 0), (0, 0)),
        dimension_numbers=("NCHW", "OIHW", "NCHW"))
    return y + b2[None, :, None, None]


# TODO(synk): loss()/forward_train() (gaussian target drawing, focal/L1 losses)
# are host-side training utilities and are not implemented as Pallas kernels.

if __name__ == "__main__":
    B, CIN, H, W = 2, 16, 16, 16
    key = jax.random.PRNGKey(0)
    x = jax.random.normal(key, (B, CIN, H, W), jnp.float32)

    head = CenterNetHeadTeaPallas(in_channels=CIN, num_hm_cls=3, seed=0)
    # forward() mirrors forward_single(features) with f = features[0].
    features = [x]
    outputs = head.forward(features[0])
    outputs = jax.tree_util.tree_map(jax.block_until_ready, outputs)

    expected_shapes = {"hm": (B, 3, H, W), "wh": (B, 2, H, W), "off": (B, 2, H, W)}
    for name, shp in expected_shapes.items():
        assert outputs[name].shape == shp, (name, outputs[name].shape)

    # bf16 MXU matmuls (f32 accumulation) vs f32 XLA reference -> loose tol.
    for name in ("hm", "wh", "off"):
        ref = _reference_head(x, head.torch_params[name])
        np.testing.assert_allclose(np.asarray(outputs[name]), np.asarray(ref),
                                   rtol=5e-2, atol=5e-2)

    print("KERNEL_OK")
</pallas_src>

<mosaic_0001>
module attributes {stable_mosaic.version = 11 : i64} {
  func.func @_fused_heads_kernel(%arg0: i32, %arg1: memref<1x18x18x16xbf16, #tpu.memory_space<vmem>>, %arg2: memref<144x24xbf16, #tpu.memory_space<vmem>>, %arg3: memref<1x24xf32, #tpu.memory_space<vmem>>, %arg4: memref<24x128xbf16, #tpu.memory_space<vmem>>, %arg5: memref<1x128xf32, #tpu.memory_space<vmem>>, %arg6: memref<1x256x128xf32, #tpu.memory_space<vmem>>, %arg7: memref<256x144xbf16, #tpu.memory_space<vmem>>) attributes {dimension_semantics = [#tpu.dimension_semantics<parallel>], iteration_bounds = array<i64: 2>, scalar_prefetch = 0 : i64, scratch_operands = 1 : i64, tpu.core_type = #tpu.core_type<tc>, window_params = [{transform_indices = @transform_0, window_bounds = array<i64: 1, 18, 18, 16>}, {pipeline_mode = #tpu.pipeline_mode<synchronous>, transform_indices = @transform_1, window_bounds = array<i64: 144, 24>}, {pipeline_mode = #tpu.pipeline_mode<synchronous>, transform_indices = @transform_2, window_bounds = array<i64: 1, 24>}, {pipeline_mode = #tpu.pipeline_mode<synchronous>, transform_indices = @transform_3, window_bounds = array<i64: 24, 128>}, {pipeline_mode = #tpu.pipeline_mode<synchronous>, transform_indices = @transform_4, window_bounds = array<i64: 1, 128>}, {transform_indices = @transform_5, window_bounds = array<i64: 1, 256, 128>}]} {
    %c0 = arith.constant 0 : index
    %c0_0 = arith.constant 0 : index
    %c0_1 = arith.constant 0 : index
    %c0_2 = arith.constant 0 : index
    %0 = vector.load %arg1[%c0, %c0_0, %c0_1, %c0_2] : memref<1x18x18x16xbf16, #tpu.memory_space<vmem>>, vector<1x18x18x16xbf16>
    %1 = vector.shape_cast %0 : vector<1x18x18x16xbf16> to vector<18x18x16xbf16>
    %2 = vector.extract_strided_slice %1 {offsets = [0, 0, 0], sizes = [16, 16, 16], strides = [1, 1, 1]} : vector<18x18x16xbf16> to vector<16x16x16xbf16>
    %3 = vector.shape_cast %2 : vector<16x16x16xbf16> to vector<256x16xbf16>
    %c0_3 = arith.constant 0 : index
    %c0_4 = arith.constant 0 : index
    %4 = vector.load %arg7[%c0_3, %c0_4] : memref<256x144xbf16, #tpu.memory_space<vmem>>, vector<256x16xbf16>
    tpu.vector_store %arg7[%c0_3, %c0_4], %3 {strides = array<i32>} : memref<256x144xbf16, #tpu.memory_space<vmem>>, vector<256x16xbf16>,
    %5 = vector.extract_strided_slice %1 {offsets = [0, 1, 0], sizes = [16, 16, 16], strides = [1, 1, 1]} : vector<18x18x16xbf16> to vector<16x16x16xbf16>
    %6 = vector.shape_cast %5 : vector<16x16x16xbf16> to vector<256x16xbf16>
    %c0_5 = arith.constant 0 : index
    %c16 = arith.constant 16 : index
    %7 = vector.load %arg7[%c0_5, %c16] : memref<256x144xbf16, #tpu.memory_space<vmem>>, vector<256x16xbf16>
    tpu.vector_store %arg7[%c0_5, %c16], %6 {strides = array<i32>} : memref<256x144xbf16, #tpu.memory_space<vmem>>, vector<256x16xbf16>,
    %8 = vector.extract_strided_slice %1 {offsets = [0, 2, 0], sizes = [16, 16, 16], strides = [1, 1, 1]} : vector<18x18x16xbf16> to vector<16x16x16xbf16>
    %9 = vector.shape_cast %8 : vector<16x16x16xbf16> to vector<256x16xbf16>
    %c0_6 = arith.constant 0 : index
    %c32 = arith.constant 32 : index
    %10 = vector.load %arg7[%c0_6, %c32] : memref<256x144xbf16, #tpu.memory_space<vmem>>, vector<256x16xbf16>
    tpu.vector_store %arg7[%c0_6, %c32], %9 {strides = array<i32>} : memref<256x144xbf16, #tpu.memory_space<vmem>>, vector<256x16xbf16>,
    %11 = vector.extract_strided_slice %1 {offsets = [1, 0, 0], sizes = [16, 16, 16], strides = [1, 1, 1]} : vector<18x18x16xbf16> to vector<16x16x16xbf16>
    %12 = vector.shape_cast %11 : vector<16x16x16xbf16> to vector<256x16xbf16>
    %c0_7 = arith.constant 0 : index
    %c48 = arith.constant 48 : index
    %13 = vector.load %arg7[%c0_7, %c48] : memref<256x144xbf16, #tpu.memory_space<vmem>>, vector<256x16xbf16>
    tpu.vector_store %arg7[%c0_7, %c48], %12 {strides = array<i32>} : memref<256x144xbf16, #tpu.memory_space<vmem>>, vector<256x16xbf16>,
    %14 = vector.extract_strided_slice %1 {offsets = [1, 1, 0], sizes = [16, 16, 16], strides = [1, 1, 1]} : vector<18x18x16xbf16> to vector<16x16x16xbf16>
    %15 = vector.shape_cast %14 : vector<16x16x16xbf16> to vector<256x16xbf16>
    %c0_8 = arith.constant 0 : index
    %c64 = arith.constant 64 : index
    %16 = vector.load %arg7[%c0_8, %c64] : memref<256x144xbf16, #tpu.memory_space<vmem>>, vector<256x16xbf16>
    tpu.vector_store %arg7[%c0_8, %c64], %15 {strides = array<i32>} : memref<256x144xbf16, #tpu.memory_space<vmem>>, vector<256x16xbf16>,
    %17 = vector.extract_strided_slice %1 {offsets = [1, 2, 0], sizes = [16, 16, 16], strides = [1, 1, 1]} : vector<18x18x16xbf16> to vector<16x16x16xbf16>
    %18 = vector.shape_cast %17 : vector<16x16x16xbf16> to vector<256x16xbf16>
    %c0_9 = arith.constant 0 : index
    %c80 = arith.constant 80 : index
    %19 = vector.load %arg7[%c0_9, %c80] : memref<256x144xbf16, #tpu.memory_space<vmem>>, vector<256x16xbf16>
    tpu.vector_store %arg7[%c0_9, %c80], %18 {strides = array<i32>} : memref<256x144xbf16, #tpu.memory_space<vmem>>, vector<256x16xbf16>,
    %20 = vector.extract_strided_slice %1 {offsets = [2, 0, 0], sizes = [16, 16, 16], strides = [1, 1, 1]} : vector<18x18x16xbf16> to vector<16x16x16xbf16>
    %21 = vector.shape_cast %20 : vector<16x16x16xbf16> to vector<256x16xbf16>
    %c0_10 = arith.constant 0 : index
    %c96 = arith.constant 96 : index
    %22 = vector.load %arg7[%c0_10, %c96] : memref<256x144xbf16, #tpu.memory_space<vmem>>, vector<256x16xbf16>
    tpu.vector_store %arg7[%c0_10, %c96], %21 {strides = array<i32>} : memref<256x144xbf16, #tpu.memory_space<vmem>>, vector<256x16xbf16>,
    %23 = vector.extract_strided_slice %1 {offsets = [2, 1, 0], sizes = [16, 16, 16], strides = [1, 1, 1]} : vector<18x18x16xbf16> to vector<16x16x16xbf16>
    %24 = vector.shape_cast %23 : vector<16x16x16xbf16> to vector<256x16xbf16>
    %c0_11 = arith.constant 0 : index
    %c112 = arith.constant 112 : index
    %25 = vector.load %arg7[%c0_11, %c112] : memref<256x144xbf16, #tpu.memory_space<vmem>>, vector<256x16xbf16>
    tpu.vector_store %arg7[%c0_11, %c112], %24 {strides = array<i32>} : memref<256x144xbf16, #tpu.memory_space<vmem>>, vector<256x16xbf16>,
    %26 = vector.extract_strided_slice %1 {offsets = [2, 2, 0], sizes = [16, 16, 16], strides = [1, 1, 1]} : vector<18x18x16xbf16> to vector<16x16x16xbf16>
    %27 = vector.shape_cast %26 : vector<16x16x16xbf16> to vector<256x16xbf16>
    %c0_12 = arith.constant 0 : index
    %c128 = arith.constant 128 : index
    %28 = vector.load %arg7[%c0_12, %c128] : memref<256x144xbf16, #tpu.memory_space<vmem>>, vector<256x16xbf16>
    tpu.vector_store %arg7[%c0_12, %c128], %27 {strides = array<i32>} : memref<256x144xbf16, #tpu.memory_space<vmem>>, vector<256x16xbf16>,
    %c0_13 = arith.constant 0 : index
    %c0_14 = arith.constant 0 : index
    %29 = vector.load %arg7[%c0_13, %c0_14] : memref<256x144xbf16, #tpu.memory_space<vmem>>, vector<256x144xbf16>
    %c0_15 = arith.constant 0 : index
    %c0_16 = arith.constant 0 : index
    %30 = vector.load %arg2[%c0_15, %c0_16] : memref<144x24xbf16, #tpu.memory_space<vmem>>, vector<144x24xbf16>
    %cst = arith.constant dense<0.000000e+00> : vector<256x24xf32>
    %31 = tpu.matmul %29, %30, %cst {dimension_numbers = #tpu.dot_dimension_numbers<[1], [0], [0], [1], [0, 0, 1, 1], [], []>} : vector<256x144xbf16>, vector<144x24xbf16>, vector<256x24xf32> -> vector<256x24xf32>
    %c0_17 = arith.constant 0 : index
    %c0_18 = arith.constant 0 : index
    %32 = vector.load %arg3[%c0_17, %c0_18] : memref<1x24xf32, #tpu.memory_space<vmem>>, vector<1x24xf32>
    %33 = vector.broadcast %32 : vector<1x24xf32> to vector<256x24xf32>
    %34 = arith.addf %31, %33 : vector<256x24xf32>
    %cst_19 = arith.constant 0.000000e+00 : f32
    %35 = vector.broadcast %cst_19 : f32 to vector<256x24xf32>
    %36 = arith.maximumf %34, %35 : vector<256x24xf32>
    %37 = arith.truncf %36 : vector<256x24xf32> to vector<256x24xbf16>
    %c0_20 = arith.constant 0 : index
    %c0_21 = arith.constant 0 : index
    %38 = vector.load %arg4[%c0_20, %c0_21] : memref<24x128xbf16, #tpu.memory_space<vmem>>, vector<24x128xbf16>
    %cst_22 = arith.constant dense<0.000000e+00> : vector<256x128xf32>
    %39 = tpu.matmul %37, %38, %cst_22 {dimension_numbers = #tpu.dot_dimension_numbers<[1], [0], [0], [1], [0, 0, 1, 1], [], []>} : vector<256x24xbf16>, vector<24x128xbf16>, vector<256x128xf32> -> vector<256x128xf32>
    %c0_23 = arith.constant 0 : index
    %c0_24 = arith.constant 0 : index
    %40 = vector.load %arg5[%c0_23, %c0_24] : memref<1x128xf32, #tpu.memory_space<vmem>>, vector<1x128xf32>
    %41 = vector.broadcast %40 : vector<1x128xf32> to vector<256x128xf32>
    %42 = arith.addf %39, %41 : vector<256x128xf32>
    %c0_25 = arith.constant 0 : index
    %c0_26 = arith.constant 0 : index
    %c0_27 = arith.constant 0 : index
    %43 = vector.load %arg6[%c0_25, %c0_26, %c0_27] : memref<1x256x128xf32, #tpu.memory_space<vmem>>, vector<1x256x128xf32>
    %44 = vector.shape_cast %43 : vector<1x256x128xf32> to vector<256x128xf32>
    %45 = vector.shape_cast %42 : vector<256x128xf32> to vector<1x256x128xf32>
    tpu.vector_store %arg6[%c0_25, %c0_26, %c0_27], %45 {strides = array<i32>} : memref<1x256x128xf32, #tpu.memory_space<vmem>>, vector<1x256x128xf32>,
    return
  }
  func.func @transform_0(%arg0: i32) -> (i32, i32, i32, i32) {
    %c0_i32 = arith.constant 0 : i32
    %c0_i32_0 = arith.constant 0 : i32
    %c0_i32_1 = arith.constant 0 : i32
    %c0_i32_2 = arith.constant 0 : i32
    return %arg0, %c0_i32, %c0_i32_0, %c0_i32_1 : i32, i32, i32, i32
  }
  func.func @transform_1(%arg0: i32) -> (i32, i32) {
    %c0_i32 = arith.constant 0 : i32
    %c0_i32_0 = arith.constant 0 : i32
    %c0_i32_1 = arith.constant 0 : i32
    return %c0_i32, %c0_i32_0 : i32, i32
  }
  func.func @transform_2(%arg0: i32) -> (i32, i32) {
    %c0_i32 = arith.constant 0 : i32
    %c0_i32_0 = arith.constant 0 : i32
    %c0_i32_1 = arith.constant 0 : i32
    return %c0_i32, %c0_i32_0 : i32, i32
  }
  func.func @transform_3(%arg0: i32) -> (i32, i32) {
    %c0_i32 = arith.constant 0 : i32
    %c0_i32_0 = arith.constant 0 : i32
    %c0_i32_1 = arith.constant 0 : i32
    return %c0_i32, %c0_i32_0 : i32, i32
  }
  func.func @transform_4(%arg0: i32) -> (i32, i32) {
    %c0_i32 = arith.constant 0 : i32
    %c0_i32_0 = arith.constant 0 : i32
    %c0_i32_1 = arith.constant 0 : i32
    return %c0_i32, %c0_i32_0 : i32, i32
  }
  func.func @transform_5(%arg0: i32) -> (i32, i32, i32) {
    %c0_i32 = arith.constant 0 : i32
    %c0_i32_0 = arith.constant 0 : i32
    %c0_i32_1 = arith.constant 0 : i32
    return %arg0, %c0_i32, %c0_i32_0 : i32, i32, i32
  }
}

</mosaic_0001>

<llo_original>
// kernel: forward.1
$region0: #{forward.1}
  #allocation0 [shape = 'u32[]', space=smem, size = 0x4, offset = 0x4, fixed_abs, tag = 'smem constant byte address 0x4 - core index']
  #allocation1 [shape = 'u32[144,128]{1,0:T(1,128)}', space=vmem, size = 0x12000, scoped, tag = 'internal scratch']
  #allocation2 [shape = 'bf16[256,144]{1,0:T(8,128)(2,1)}', space=vmem, size = 0x20000, scoped, tag = 'scratch operand']
  %s0 = inlined_call_operand.vmem [shape: bf16[2,18,18,16], index: 0, kind: input, shape index: {}]
  %s1 = inlined_call_operand.vmem [shape: bf16[144,24], index: 1, kind: input, shape index: {}]
  %s2 = inlined_call_operand.vmem [shape: f32[1,24], index: 2, kind: input, shape index: {}]
  %s3 = inlined_call_operand.vmem [shape: bf16[24,128], index: 3, kind: input, shape index: {}]
  %s4 = inlined_call_operand.vmem [shape: f32[1,128], index: 4, kind: input, shape index: {}]
  %s5 = inlined_call_operand.vmem [shape: f32[2,256,128], index: 5, kind: output, shape index: {}]
  %s6 = sld [smem:[#allocation0]]
  $region53: #{forward.1} parent=0
    _
  %s8 = ssub.s32 1, %s6
  %s9 = scalar_select 0, %s8, %s6
  loop: start=0, step=1, limit=4
  $region2: #{forward.1} parent=0 // loop_pre_header
    _
  $region3: #{forward.1} parent=0 // loop_header
    %s11 = sphi 0, %s15
    %p12 = scmp.ge.s32.totalorder %s11, 4
    %s21 = sphi 0, %s23
    %s24 = sphi 0, %s21
    %s25 = sphi 0, %s24
    %s41 = sphi 0, %s25
    %s45 = sphi 0, %s45
    %s47 = sphi 0, %s45
    %s48 = sphi 0, %s47
    %s62 = sphi 0, %s48
    %s66 = sphi 0, %s66
    %s68 = sphi 0, %s66
    %s69 = sphi 0, %s68
    %s83 = sphi 0, %s69
    %s87 = sphi 0, %s87
    %s89 = sphi 0, %s87
    %s90 = sphi 0, %s89
    %s104 = sphi 0, %s90
    %s108 = sphi 0, %s108
    %s110 = sphi 0, %s108
    %s111 = sphi 0, %s110
    %s125 = sphi 0, %s111
    %s131 = sphi 0, %s133
    %s134 = sphi 0, %s131
    %s135 = sphi 0, %s134
    %s151 = sphi 0, %s135
  $region4: #{forward.1} parent=0 // loop_header_branch
    %14 = sbr.rel (%p12) target = $region8
  $region5: #{forward.1} parent=0 // loop_body
    %s16 = ssub.s32 %s11, 1
    %s17 = ssub.s32 %s11, 2
    %s18 = sadd.s32 %s11, 1
    %s19 = ssub.s32 %s11, %s18
    %p20 = scmp.eq.s32.totalorder %s19, 0
    %s22 = sadd.s32 %s21, 1
    %s23 = scalar_select %p20, %s21, %s22
    %p26 = pneg %p20
    %p27 = scmp.eq.s32.totalorder %s11, 1
    %p28 = por %p26, %p27
    %p29 = scmp.ne.s32.totalorder %s21, %s24
    %p30 = scmp.eq.s32.totalorder %s11, 0
    %p31 = por %p29, %p30
    %p32 = scmp.ne.s32.totalorder %s21, %s24
    %p33 = scmp.eq.s32.totalorder %s16, 1
    %p34 = por %p32, %p33
    %p35 = scmp.ne.s32.totalorder %s24, %s25
    %p36 = scmp.eq.s32.totalorder %s16, 0
    %p37 = por %p35, %p36
    %p38 = scmp.ne.s32.totalorder %s24, %s25
    %p39 = scmp.eq.s32.totalorder %s17, 1
    %p40 = por %p38, %p39
    %p42 = scmp.ne.s32.totalorder %s25, %s41
    %p43 = scmp.eq.s32.totalorder %s17, 0
    %p44 = por %p42, %p43
    %s46 = sadd.s32 %s45, 1
    %p49 = scmp.eq.s32.totalorder %s11, 1
    %p50 = scmp.ne.s32.totalorder %s45, %s47
    %p51 = scmp.eq.s32.totalorder %s11, 0
    %p52 = por %p50, %p51
    %p53 = scmp.ne.s32.totalorder %s45, %s47
    %p54 = scmp.eq.s32.totalorder %s16, 1
    %p55 = por %p53, %p54
    %p56 = scmp.ne.s32.totalorder %s47, %s48
    %p57 = scmp.eq.s32.totalorder %s16, 0
    %p58 = por %p56, %p57
    %p59 = scmp.ne.s32.totalorder %s47, %s48
    %p60 = scmp.eq.s32.totalorder %s17, 1
    %p61 = por %p59, %p60
    %p63 = scmp.ne.s32.totalorder %s48, %s62
    %p64 = scmp.eq.s32.totalorder %s17, 0
    %p65 = por %p63, %p64
    %s67 = sadd.s32 %s66, 1
    %p70 = scmp.eq.s32.totalorder %s11, 1
    %p71 = scmp.ne.s32.totalorder %s66, %s68
    %p72 = scmp.eq.s32.totalorder %s11, 0
    %p73 = por %p71, %p72
    %p74 = scmp.ne.s32.totalorder %s66, %s68
    %p75 = scmp.eq.s32.totalorder %s16, 1
    %p76 = por %p74, %p75
    %p77 = scmp.ne.s32.totalorder %s68, %s69
    %p78 = scmp.eq.s32.totalorder %s16, 0
    %p79 = por %p77, %p78
    %p80 = scmp.ne.s32.totalorder %s68, %s69
    %p81 = scmp.eq.s32.totalorder %s17, 1
    %p82 = por %p80, %p81
    %p84 = scmp.ne.s32.totalorder %s69, %s83
    %p85 = scmp.eq.s32.totalorder %s17, 0
    %p86 = por %p84, %p85
    %s88 = sadd.s32 %s87, 1
    %p91 = scmp.eq.s32.totalorder %s11, 1
    %p92 = scmp.ne.s32.totalorder %s87, %s89
    %p93 = scmp.eq.s32.totalorder %s11, 0
    %p94 = por %p92, %p93
    %p95 = scmp.ne.s32.totalorder %s87, %s89
    %p96 = scmp.eq.s32.totalorder %s16, 1
    %p97 = por %p95, %p96
    %p98 = scmp.ne.s32.totalorder %s89, %s90
    %p99 = scmp.eq.s32.totalorder %s16, 0
    %p100 = por %p98, %p99
    %p101 = scmp.ne.s32.totalorder %s89, %s90
    %p102 = scmp.eq.s32.totalorder %s17, 1
    %p103 = por %p101, %p102
    %p105 = scmp.ne.s32.totalorder %s90, %s104
    %p106 = scmp.eq.s32.totalorder %s17, 0
    %p107 = por %p105, %p106
    %s109 = sadd.s32 %s108, 1
    %p112 = scmp.eq.s32.totalorder %s11, 1
    %p113 = scmp.ne.s32.totalorder %s108, %s110
    %p114 = scmp.eq.s32.totalorder %s11, 0
    %p115 = por %p113, %p114
    %p116 = scmp.ne.s32.totalorder %s108, %s110
    %p117 = scmp.eq.s32.totalorder %s16, 1
    %p118 = por %p116, %p117
    %p119 = scmp.ne.s32.totalorder %s110, %s111
    %p120 = scmp.eq.s32.totalorder %s16, 0
    %p121 = por %p119, %p120
    %p122 = scmp.ne.s32.totalorder %s110, %s111
    %p123 = scmp.eq.s32.totalorder %s17, 1
    %p124 = por %p122, %p123
    %p126 = scmp.ne.s32.totalorder %s111, %s125
    %p127 = scmp.eq.s32.totalorder %s17, 0
    %p128 = por %p126, %p127
    %s129 = ssub.s32 %s11, %s18
    %p130 = scmp.eq.s32.totalorder %s129, 0
    %s132 = sadd.s32 %s131, 1
    %s133 = scalar_select %p130, %s131, %s132
    %p136 = pneg %p130
    %p137 = scmp.eq.s32.totalorder %s11, 1
    %p138 = por %p136, %p137
    %p139 = scmp.ne.s32.totalorder %s131, %s134
    %p140 = scmp.eq.s32.totalorder %s11, 0
    %p141 = por %p139, %p140
    %p142 = scmp.ne.s32.totalorder %s131, %s134
    %p143 = scmp.eq.s32.totalorder %s16, 1
    %p144 = por %p142, %p143
    %p145 = scmp.ne.s32.totalorder %s134, %s135
    %p146 = scmp.eq.s32.totalorder %s16, 0
    %p147 = por %p145, %p146
    %p148 = scmp.ne.s32.totalorder %s134, %s135
    %p149 = scmp.eq.s32.totalorder %s17, 1
    %p150 = por %p148, %p149
    %p152 = scmp.ne.s32.totalorder %s135, %s151
    %p153 = scmp.eq.s32.totalorder %s17, 0
    %p154 = por %p152, %p153
    %p155 = scmp.le.s32.totalorder 1, %s11
    %p156 = scmp.lt.s32.totalorder %s11, 3
    %p157 = pnand %p155, %p156
    %p158 = pneg %p157
    // Predicated region
    $region9: #{forward.1} parent=5 // pred_check
      _
    $region10: #{forward.1} parent=5 // pred_check_branch
      %160 = sbr.rel (%p157) target = $region12
    $region11: #{forward.1} parent=5 // pred_region
      %s161 = ssub.s32 %s11, 1
      // Predicated region
      $region13: #{forward.1} parent=11 // pred_check
        %p162 = pneg %p58
      $region14: #{forward.1} parent=11 // pred_check_branch
        %164 = sbr.rel (%p162) target = $region16
      $region15: #{forward.1} parent=11 // pred_region
        _
      $region16: #{forward.1} parent=11 // pred_fallthru
        _
      // Predicated region
      $region17: #{forward.1} parent=11 // pred_check
        %p165 = pneg %p79
      $region18: #{forward.1} parent=11 // pred_check_branch
        %167 = sbr.rel (%p165) target = $region20
      $region19: #{forward.1} parent=11 // pred_region
        _
      $region20: #{forward.1} parent=11 // pred_fallthru
        _
      // Predicated region
      $region21: #{forward.1} parent=11 // pred_check
        %p168 = pneg %p100
      $region22: #{forward.1} parent=11 // pred_check_branch
        %170 = sbr.rel (%p168) target = $region24
      $region23: #{forward.1} parent=11 // pred_region
        _
      $region24: #{forward.1} parent=11 // pred_fallthru
        _
      // Predicated region
      $region25: #{forward.1} parent=11 // pred_check
        %p171 = pneg %p121
      $region26: #{forward.1} parent=11 // pred_check_branch
        %173 = sbr.rel (%p171) target = $region28
      $region27: #{forward.1} parent=11 // pred_region
        _
      $region28: #{forward.1} parent=11 // pred_fallthru
        _
    $region12: #{forward.1} parent=5 // pred_fallthru
      _
    %p174 = scmp.lt.s32.totalorder %s11, 2
    // Predicated region
    $region29: #{forward.1} parent=5 // pred_check
      %p175 = pneg %p174
    $region30: #{forward.1} parent=5 // pred_check_branch
      %177 = sbr.rel (%p175) target = $region32
    $region31: #{forward.1} parent=5 // pred_region
      // Predicated region
      $region33: #{forward.1} parent=31 // pred_check
        %p178 = pneg %p31
      $region34: #{forward.1} parent=31 // pred_check_branch
        %180 = sbr.rel (%p178) target = $region36
      $region35: #{forward.1} parent=31 // pred_region
        %p181 = scmp.lt.s32.totalorder %s11, 1
        %s182 = scalar_select %p181, %s11, 1
        %s183 = smul.addr %s182, 54
        %s184 = smul.addr %s183, 4
        %s185 = scalar_lea.vmem %s0, %s184
      $region36: #{forward.1} parent=31 // pred_fallthru
        _
    $region32: #{forward.1} parent=5 // pred_fallthru
      _
    %p186 = scmp.le.s32.totalorder 1, %s11
    %p187 = scmp.lt.s32.totalorder %s11, 3
    %p188 = pnand %p186, %p187
    %p189 = pneg %p188
    // Predicated region
    $region37: #{forward.1} parent=5 // pred_check
      _
    $region38: #{forward.1} parent=5 // pred_check_branch
      %191 = sbr.rel (%p188) target = $region40
    $region39: #{forward.1} parent=5 // pred_region
      %s192 = ssub.s32 %s11, 1
      %p193 = scmp.lt.s32.totalorder %s16, 1
      %s194 = scalar_select %p193, %s16, 1
      %s195 = smul.addr %s194, 54
      %s196 = smul.addr %s195, 4
      %s197 = scalar_lea.vmem %s0, %s196
      %p198 = pneg %p37
      %p199 = pneg %p34
      %p200 = pneg %p58
      %p201 = pneg %p55
      %p202 = pneg %p79
      %p203 = pneg %p76
      %p204 = pneg %p100
      %p205 = pneg %p97
      %p206 = pneg %p121
      %p207 = pneg %p118
      %p208 = pneg %p147
      %p209 = pneg %p144
      %p210 = scmp.lt.s32.totalorder %s16, 1
      %s211 = scalar_select %p210, %s16, 1
      %s212 = smul.addr %s211, 32
      %s213 = smul.addr %s212, 8
      %s214 = scalar_lea.vmem %s5, %s213
      %p215 = scmp.lt.s32.totalorder %s16, 1
      %s216 = scalar_select %p215, %s16, 1
      %s217 = smul.addr %s216, 54
      %s218 = smul.addr %s217, 4
      %s219 = scalar_lea.vmem %s0, %s218
      %p220 = scmp.lt.s32.totalorder %s16, 1
      %s221 = scalar_select %p220, %s16, 1
      %s222 = smul.addr %s221, 32
      %s223 = smul.addr %s222, 8
      %s224 = scalar_lea.vmem %s5, %s223
      %v226 = vld [vmem:[%s219] sm:$0xf]
      %v227 = vld [vmem:[%s219 + $0x4] sm:$0xf]
      %v228 = vld [vmem:[%s219 + $0x8] sm:$0x1]
      %v229 = vld [vmem:[%s219 + $0xc] sm:$0xf]
      %v230 = vld [vmem:[%s219 + $0x10] sm:$0xf]
      %v231 = vld [vmem:[%s219 + $0x14] sm:$0x1]
      %v232 = vld [vmem:[%s219 + $0x18] sm:$0xf]
      %v233 = vld [vmem:[%s219 + $0x1c] sm:$0xf]
      %v234 = vld [vmem:[%s219 + $0x20] sm:$0x1]
      %v235 = vld [vmem:[%s219 + $0x24] sm:$0xf]
      %v236 = vld [vmem:[%s219 + $0x28] sm:$0xf]
      %v237 = vld [vmem:[%s219 + $0x2c] sm:$0x1]
      %v238 = vld [vmem:[%s219 + $0x30] sm:$0xf]
      %v239 = vld [vmem:[%s219 + $0x34] sm:$0xf]
      %v240 = vld [vmem:[%s219 + $0x38] sm:$0x1]
      %v241 = vld [vmem:[%s219 + $0x3c] sm:$0xf]
      %v242 = vld [vmem:[%s219 + $0x40] sm:$0xf]
      %v243 = vld [vmem:[%s219 + $0x44] sm:$0x1]
      %v244 = vld [vmem:[%s219 + $0x48] sm:$0xf]
      %v245 = vld [vmem:[%s219 + $0x4c] sm:$0xf]
      %v246 = vld [vmem:[%s219 + $0x50] sm:$0x1]
      %v247 = vld [vmem:[%s219 + $0x54] sm:$0xf]
      %v248 = vld [vmem:[%s219 + $0x58] sm:$0xf]
      %v249 = vld [vmem:[%s219 + $0x5c] sm:$0x1]
      %v250 = vld [vmem:[%s219 + $0x60] sm:$0xf]
      %v251 = vld [vmem:[%s219 + $0x64] sm:$0xf]
      %v252 = vld [vmem:[%s219 + $0x68] sm:$0x1]
      %v253 = vld [vmem:[%s219 + $0x6c] sm:$0xf]
      %v254 = vld [vmem:[%s219 + $0x70] sm:$0xf]
      %v255 = vld [vmem:[%s219 + $0x74] sm:$0x1]
      %v256 = vld [vmem:[%s219 + $0x78] sm:$0xf]
      %v257 = vld [vmem:[%s219 + $0x7c] sm:$0xf]
      %v258 = vld [vmem:[%s219 + $0x80] sm:$0x1]
      %v259 = vld [vmem:[%s219 + $0x84] sm:$0xf]
      %v260 = vld [vmem:[%s219 + $0x88] sm:$0xf]
      %v261 = vld [vmem:[%s219 + $0x8c] sm:$0x1]
      %v262 = vld [vmem:[%s219 + $0x90] sm:$0xf]
      %v263 = vld [vmem:[%s219 + $0x94] sm:$0xf]
      %v264 = vld [vmem:[%s219 + $0x98] sm:$0x1]
      %v265 = vld [vmem:[%s219 + $0x9c] sm:$0xf]
      %v266 = vld [vmem:[%s219 + $0xa0] sm:$0xf]
      %v267 = vld [vmem:[%s219 + $0xa4] sm:$0x1]
      %v268 = vld [vmem:[%s219 + $0xa8] sm:$0xf]
      %v269 = vld [vmem:[%s219 + $0xac] sm:$0xf]
      %v270 = vld [vmem:[%s219 + $0xb0] sm:$0x1]
      %v271 = vld [vmem:[%s219 + $0xb4] sm:$0xf]
      %v272 = vld [vmem:[%s219 + $0xb8] sm:$0xf]
      %v273 = vld [vmem:[%s219 + $0xbc] sm:$0x1]
      %v274 = vld [vmem:[%s219 + $0xc0] sm:$0xf]
      %v275 = vld [vmem:[%s219 + $0xc4] sm:$0xf]
      %v276 = vld [vmem:[%s219 + $0xc8] sm:$0x1]
      %v277 = vld [vmem:[%s219 + $0xcc] sm:$0xf]
      %v278 = vld [vmem:[%s219 + $0xd0] sm:$0xf]
      %v279 = vld [vmem:[%s219 + $0xd4] sm:$0x1]
      %vm280 = vcmask 125952
      %281 = vst.msk [vmem:[#allocation2] sm:$0xf] %vm280, %v226
      %282 = vst.msk [vmem:[#allocation2 + $0x8] sm:$0xf] %vm280, %v227
      %283 = vst.msk [vmem:[#allocation2 + $0x10] sm:$0xf] %vm280, %v229
      %284 = vst.msk [vmem:[#allocation2 + $0x18] sm:$0xf] %vm280, %v230
      %285 = vst.msk [vmem:[#allocation2 + $0x20] sm:$0xf] %vm280, %v232
      %286 = vst.msk [vmem:[#allocation2 + $0x28] sm:$0xf] %vm280, %v233
      %287 = vst.msk [vmem:[#allocation2 + $0x30] sm:$0xf] %vm280, %v235
      %288 = vst.msk [vmem:[#allocation2 + $0x38] sm:$0xf] %vm280, %v236
      %289 = vst.msk [vmem:[#allocation2 + $0x40] sm:$0xf] %vm280, %v238
      %290 = vst.msk [vmem:[#allocation2 + $0x48] sm:$0xf] %vm280, %v239
      %291 = vst.msk [vmem:[#allocation2 + $0x50] sm:$0xf] %vm280, %v241
      %292 = vst.msk [vmem:[#allocation2 + $0x58] sm:$0xf] %vm280, %v242
      %293 = vst.msk [vmem:[#allocation2 + $0x60] sm:$0xf] %vm280, %v244
      %294 = vst.msk [vmem:[#allocation2 + $0x68] sm:$0xf] %vm280, %v245
      %295 = vst.msk [vmem:[#allocation2 + $0x70] sm:$0xf] %vm280, %v247
      %296 = vst.msk [vmem:[#allocation2 + $0x78] sm:$0xf] %vm280, %v248
      %297 = vst.msk [vmem:[#allocation2 + $0x80] sm:$0xf] %vm280, %v250
      %298 = vst.msk [vmem:[#allocation2 + $0x88] sm:$0xf] %vm280, %v251
      %299 = vst.msk [vmem:[#allocation2 + $0x90] sm:$0xf] %vm280, %v253
      %300 = vst.msk [vmem:[#allocation2 + $0x98] sm:$0xf] %vm280, %v254
      %301 = vst.msk [vmem:[#allocation2 + $0xa0] sm:$0xf] %vm280, %v256
      %302 = vst.msk [vmem:[#allocation2 + $0xa8] sm:$0xf] %vm280, %v257
      %303 = vst.msk [vmem:[#allocation2 + $0xb0] sm:$0xf] %vm280, %v259
      %304 = vst.msk [vmem:[#allocation2 + $0xb8] sm:$0xf] %vm280, %v260
      %305 = vst.msk [vmem:[#allocation2 + $0xc0] sm:$0xf] %vm280, %v262
      %306 = vst.msk [vmem:[#allocation2 + $0xc8] sm:$0xf] %vm280, %v263
      %307 = vst.msk [vmem:[#allocation2 + $0xd0] sm:$0xf] %vm280, %v265
      %308 = vst.msk [vmem:[#allocation2 + $0xd8] sm:$0xf] %vm280, %v266
      %309 = vst.msk [vmem:[#allocation2 + $0xe0] sm:$0xf] %vm280, %v268
      %310 = vst.msk [vmem:[#allocation2 + $0xe8] sm:$0xf] %vm280, %v269
      %311 = vst.msk [vmem:[#allocation2 + $0xf0] sm:$0xf] %vm280, %v271
      %312 = vst.msk [vmem:[#allocation2 + $0xf8] sm:$0xf] %vm280, %v272
      %vm313 = vsmask.f32 3328
      %vm314 = vsmask.f32 7440
      %vm315 = vmor %vm313, %vm314
      %v317 = vshrl.u32 %v226, 16
      %v319 = vrot.slane %v317, 4
      %v320 = vshll.u32 %v226, 16
      %v322 = vrot.slane %v320, 5
      %v323 = vor.u32 %v319, %v322
      %v324 = vrot.slane %v323, 4
      %v326 = vshll.u32 %v227, 16
      %v328 = vrot.slane %v326, 5
      %v329 = vsel %vm315, %v324, %v328
      %v330 = vshrl.u32 %v227, 16
      %v332 = vrot.slane %v330, 4
      %v333 = vor.u32 %v332, %v328
      %v334 = vrot.slane %v333, 4
      %v336 = vshll.u32 %v228, 16
      %v338 = vrot.slane %v336, 5
      %v339 = vsel %vm315, %v334, %v338
      %v341 = vshrl.u32 %v229, 16
      %v343 = vrot.slane %v341, 4
      %v344 = vshll.u32 %v229, 16
      %v346 = vrot.slane %v344, 5
      %v347 = vor.u32 %v343, %v346
      %v348 = vrot.slane %v347, 4
      %v350 = vshll.u32 %v230, 16
      %v352 = vrot.slane %v350, 5
      %v353 = vsel %vm315, %v348, %v352
      %v354 = vshrl.u32 %v230, 16
      %v356 = vrot.slane %v354, 4
      %v357 = vor.u32 %v356, %v352
      %v358 = vrot.slane %v357, 4
      %v360 = vshll.u32 %v231, 16
      %v362 = vrot.slane %v360, 5
      %v363 = vsel %vm315, %v358, %v362
      %v365 = vshrl.u32 %v232, 16
      %v367 = vrot.slane %v365, 4
      %v368 = vshll.u32 %v232, 16
      %v370 = vrot.slane %v368, 5
      %v371 = vor.u32 %v367, %v370
      %v372 = vrot.slane %v371, 4
      %v374 = vshll.u32 %v233, 16
      %v376 = vrot.slane %v374, 5
      %v377 = vsel %vm315, %v372, %v376
      %v378 = vshrl.u32 %v233, 16
      %v380 = vrot.slane %v378, 4
      %v381 = vor.u32 %v380, %v376
      %v382 = vrot.slane %v381, 4
      %v384 = vshll.u32 %v234, 16
      %v386 = vrot.slane %v384, 5
      %v387 = vsel %vm315, %v382, %v386
      %v389 = vshrl.u32 %v235, 16
      %v391 = vrot.slane %v389, 4
      %v392 = vshll.u32 %v235, 16
      %v394 = vrot.slane %v392, 5
      %v395 = vor.u32 %v391, %v394
      %v396 = vrot.slane %v395, 4
      %v398 = vshll.u32 %v236, 16
      %v400 = vrot.slane %v398, 5
      %v401 = vsel %vm315, %v396, %v400
      %v402 = vshrl.u32 %v236, 16
      %v404 = vrot.slane %v402, 4
      %v405 = vor.u32 %v404, %v400
      %v406 = vrot.slane %v405, 4
      %v408 = vshll.u32 %v237, 16
      %v410 = vrot.slane %v408, 5
      %v411 = vsel %vm315, %v406, %v410
      %v413 = vshrl.u32 %v238, 16
      %v415 = vrot.slane %v413, 4
      %v416 = vshll.u32 %v238, 16
      %v418 = vrot.slane %v416, 5
      %v419 = vor.u32 %v415, %v418
      %v420 = vrot.slane %v419, 4
      %v422 = vshll.u32 %v239, 16
      %v424 = vrot.slane %v422, 5
      %v425 = vsel %vm315, %v420, %v424
      %v426 = vshrl.u32 %v239, 16
      %v428 = vrot.slane %v426, 4
      %v429 = vor.u32 %v428, %v424
      %v430 = vrot.slane %v429, 4
      %v432 = vshll.u32 %v240, 16
      %v434 = vrot.slane %v432, 5
      %v435 = vsel %vm315, %v430, %v434
      %v437 = vshrl.u32 %v241, 16
      %v439 = vrot.slane %v437, 4
      %v440 = vshll.u32 %v241, 16
      %v442 = vrot.slane %v440, 5
      %v443 = vor.u32 %v439, %v442
      %v444 = vrot.slane %v443, 4
      %v446 = vshll.u32 %v242, 16
      %v448 = vrot.slane %v446, 5
      %v449 = vsel %vm315, %v444, %v448
      %v450 = vshrl.u32 %v242, 16
      %v452 = vrot.slane %v450, 4
      %v453 = vor.u32 %v452, %v448
      %v454 = vrot.slane %v453, 4
      %v456 = vshll.u32 %v243, 16
      %v458 = vrot.slane %v456, 5
      %v459 = vsel %vm315, %v454, %v458
      %v461 = vshrl.u32 %v244, 16
      %v463 = vrot.slane %v461, 4
      %v464 = vshll.u32 %v244, 16
      %v466 = vrot.slane %v464, 5
      %v467 = vor.u32 %v463, %v466
      %v468 = vrot.slane %v467, 4
      %v470 = vshll.u32 %v245, 16
      %v472 = vrot.slane %v470, 5
      %v473 = vsel %vm315, %v468, %v472
      %v474 = vshrl.u32 %v245, 16
      %v476 = vrot.slane %v474, 4
      %v477 = vor.u32 %v476, %v472
      %v478 = vrot.slane %v477, 4
      %v480 = vshll.u32 %v246, 16
      %v482 = vrot.slane %v480, 5
      %v483 = vsel %vm315, %v478, %v482
      %v485 = vshrl.u32 %v247, 16
      %v487 = vrot.slane %v485, 4
      %v488 = vshll.u32 %v247, 16
      %v490 = vrot.slane %v488, 5
      %v491 = vor.u32 %v487, %v490
      %v492 = vrot.slane %v491, 4
      %v494 = vshll.u32 %v248, 16
      %v496 = vrot.slane %v494, 5
      %v497 = vsel %vm315, %v492, %v496
      %v498 = vshrl.u32 %v248, 16
      %v500 = vrot.slane %v498, 4
      %v501 = vor.u32 %v500, %v496
      %v502 = vrot.slane %v501, 4
      %v504 = vshll.u32 %v249, 16
      %v506 = vrot.slane %v504, 5
      %v507 = vsel %vm315, %v502, %v506
      %v509 = vshrl.u32 %v250, 16
      %v511 = vrot.slane %v509, 4
      %v512 = vshll.u32 %v250, 16
      %v514 = vrot.slane %v512, 5
      %v515 = vor.u32 %v511, %v514
      %v516 = vrot.slane %v515, 4
      %v518 = vshll.u32 %v251, 16
      %v520 = vrot.slane %v518, 5
      %v521 = vsel %vm315, %v516, %v520
      %v522 = vshrl.u32 %v251, 16
      %v524 = vrot.slane %v522, 4
      %v525 = vor.u32 %v524, %v520
      %v526 = vrot.slane %v525, 4
      %v528 = vshll.u32 %v252, 16
      %v530 = vrot.slane %v528, 5
      %v531 = vsel %vm315, %v526, %v530
      %v533 = vshrl.u32 %v253, 16
      %v535 = vrot.slane %v533, 4
      %v536 = vshll.u32 %v253, 16
      %v538 = vrot.slane %v536, 5
      %v539 = vor.u32 %v535, %v538
      %v540 = vrot.slane %v539, 4
      %v542 = vshll.u32 %v254, 16
      %v544 = vrot.slane %v542, 5
      %v545 = vsel %vm315, %v540, %v544
      %v546 = vshrl.u32 %v254, 16
      %v548 = vrot.slane %v546, 4
      %v549 = vor.u32 %v548, %v544
      %v550 = vrot.slane %v549, 4
      %v552 = vshll.u32 %v255, 16
      %v554 = vrot.slane %v552, 5
      %v555 = vsel %vm315, %v550, %v554
      %v557 = vshrl.u32 %v256, 16
      %v559 = vrot.slane %v557, 4
      %v560 = vshll.u32 %v256, 16
      %v562 = vrot.slane %v560, 5
      %v563 = vor.u32 %v559, %v562
      %v564 = vrot.slane %v563, 4
      %v566 = vshll.u32 %v257, 16
      %v568 = vrot.slane %v566, 5
      %v569 = vsel %vm315, %v564, %v568
      %v570 = vshrl.u32 %v257, 16
      %v572 = vrot.slane %v570, 4
      %v573 = vor.u32 %v572, %v568
      %v574 = vrot.slane %v573, 4
      %v576 = vshll.u32 %v258, 16
      %v578 = vrot.slane %v576, 5
      %v579 = vsel %vm315, %v574, %v578
      %v581 = vshrl.u32 %v259, 16
      %v583 = vrot.slane %v581, 4
      %v584 = vshll.u32 %v259, 16
      %v586 = vrot.slane %v584, 5
      %v587 = vor.u32 %v583, %v586
      %v588 = vrot.slane %v587, 4
      %v590 = vshll.u32 %v260, 16
      %v592 = vrot.slane %v590, 5
      %v593 = vsel %vm315, %v588, %v592
      %v594 = vshrl.u32 %v260, 16
      %v596 = vrot.slane %v594, 4
      %v597 = vor.u32 %v596, %v592
      %v598 = vrot.slane %v597, 4
      %v600 = vshll.u32 %v261, 16
      %v602 = vrot.slane %v600, 5
      %v603 = vsel %vm315, %v598, %v602
      %v605 = vshrl.u32 %v262, 16
      %v607 = vrot.slane %v605, 4
      %v608 = vshll.u32 %v262, 16
      %v610 = vrot.slane %v608, 5
      %v611 = vor.u32 %v607, %v610
      %v612 = vrot.slane %v611, 4
      %v614 = vshll.u32 %v263, 16
      %v616 = vrot.slane %v614, 5
      %v617 = vsel %vm315, %v612, %v616
      %v618 = vshrl.u32 %v263, 16
      %v620 = vrot.slane %v618, 4
      %v621 = vor.u32 %v620, %v616
      %v622 = vrot.slane %v621, 4
      %v624 = vshll.u32 %v264, 16
      %v626 = vrot.slane %v624, 5
      %v627 = vsel %vm315, %v622, %v626
      %v629 = vshrl.u32 %v265, 16
      %v631 = vrot.slane %v629, 4
      %v632 = vshll.u32 %v265, 16
      %v634 = vrot.slane %v632, 5
      %v635 = vor.u32 %v631, %v634
      %v636 = vrot.slane %v635, 4
      %v638 = vshll.u32 %v266, 16
      %v640 = vrot.slane %v638, 5
      %v641 = vsel %vm315, %v636, %v640
      %v642 = vshrl.u32 %v266, 16
      %v644 = vrot.slane %v642, 4
      %v645 = vor.u32 %v644, %v640
      %v646 = vrot.slane %v645, 4
      %v648 = vshll.u32 %v267, 16
      %v650 = vrot.slane %v648, 5
      %v651 = vsel %vm315, %v646, %v650
      %v653 = vshrl.u32 %v268, 16
      %v655 = vrot.slane %v653, 4
      %v656 = vshll.u32 %v268, 16
      %v658 = vrot.slane %v656, 5
      %v659 = vor.u32 %v655, %v658
      %v660 = vrot.slane %v659, 4
      %v662 = vshll.u32 %v269, 16
      %v664 = vrot.slane %v662, 5
      %v665 = vsel %vm315, %v660, %v664
      %v666 = vshrl.u32 %v269, 16
      %v668 = vrot.slane %v666, 4
      %v669 = vor.u32 %v668, %v664
      %v670 = vrot.slane %v669, 4
      %v672 = vshll.u32 %v270, 16
      %v674 = vrot.slane %v672, 5
      %v675 = vsel %vm315, %v670, %v674
      %v677 = vshrl.u32 %v271, 16
      %v679 = vrot.slane %v677, 4
      %v680 = vshll.u32 %v271, 16
      %v682 = vrot.slane %v680, 5
      %v683 = vor.u32 %v679, %v682
      %v684 = vrot.slane %v683, 4
      %v686 = vshll.u32 %v272, 16
      %v688 = vrot.slane %v686, 5
      %v689 = vsel %vm315, %v684, %v688
      %v690 = vshrl.u32 %v272, 16
      %v692 = vrot.slane %v690, 4
      %v693 = vor.u32 %v692, %v688
      %v694 = vrot.slane %v693, 4
      %v696 = vshll.u32 %v273, 16
      %v698 = vrot.slane %v696, 5
      %v699 = vsel %vm315, %v694, %v698
      %700 = vrot.lane.b32.xlu0 %v329, 16
      %v701 = vpop.permute.xlu0 %700
      %702 = vrot.lane.b32.xlu0 %v339, 16
      %v703 = vpop.permute.xlu0 %702
      %704 = vrot.lane.b32.xlu0 %v353, 16
      %v705 = vpop.permute.xlu0 %704
      %706 = vrot.lane.b32.xlu0 %v363, 16
      %v707 = vpop.permute.xlu0 %706
      %708 = vrot.lane.b32.xlu0 %v377, 16
      %v709 = vpop.permute.xlu0 %708
      %710 = vrot.lane.b32.xlu0 %v387, 16
      %v711 = vpop.permute.xlu0 %710
      %712 = vrot.lane.b32.xlu0 %v401, 16
      %v713 = vpop.permute.xlu0 %712
      %714 = vrot.lane.b32.xlu0 %v411, 16
      %v715 = vpop.permute.xlu0 %714
      %716 = vrot.lane.b32.xlu0 %v425, 16
      %v717 = vpop.permute.xlu0 %716
      %718 = vrot.lane.b32.xlu0 %v435, 16
      %v719 = vpop.permute.xlu0 %718
      %720 = vrot.lane.b32.xlu0 %v449, 16
      %v721 = vpop.permute.xlu0 %720
      %722 = vrot.lane.b32.xlu0 %v459, 16
      %v723 = vpop.permute.xlu0 %722
      %724 = vrot.lane.b32.xlu0 %v473, 16
      %v725 = vpop.permute.xlu0 %724
      %726 = vrot.lane.b32.xlu0 %v483, 16
      %v727 = vpop.permute.xlu0 %726
      %728 = vrot.lane.b32.xlu0 %v497, 16
      %v729 = vpop.permute.xlu0 %728
      %730 = vrot.lane.b32.xlu0 %v507, 16
      %v731 = vpop.permute.xlu0 %730
      %732 = vrot.lane.b32.xlu0 %v521, 16
      %v733 = vpop.permute.xlu0 %732
      %734 = vrot.lane.b32.xlu0 %v531, 16
      %v735 = vpop.permute.xlu0 %734
      %736 = vrot.lane.b32.xlu0 %v545, 16
      %v737 = vpop.permute.xlu0 %736
      %738 = vrot.lane.b32.xlu0 %v555, 16
      %v739 = vpop.permute.xlu0 %738
      %740 = vrot.lane.b32.xlu0 %v569, 16
      %v741 = vpop.permute.xlu0 %740
      %742 = vrot.lane.b32.xlu0 %v579, 16
      %v743 = vpop.permute.xlu0 %742
      %744 = vrot.lane.b32.xlu0 %v593, 16
      %v745 = vpop.permute.xlu0 %744
      %746 = vrot.lane.b32.xlu0 %v603, 16
      %v747 = vpop.permute.xlu0 %746
      %748 = vrot.lane.b32.xlu0 %v617, 16
      %v749 = vpop.permute.xlu0 %748
      %750 = vrot.lane.b32.xlu0 %v627, 16
      %v751 = vpop.permute.xlu0 %750
      %752 = vrot.lane.b32.xlu0 %v641, 16
      %v753 = vpop.permute.xlu0 %752
      %754 = vrot.lane.b32.xlu0 %v651, 16
      %v755 = vpop.permute.xlu0 %754
      %756 = vrot.lane.b32.xlu0 %v665, 16
      %v757 = vpop.permute.xlu0 %756
      %758 = vrot.lane.b32.xlu0 %v675, 16
      %v759 = vpop.permute.xlu0 %758
      %760 = vrot.lane.b32.xlu0 %v689, 16
      %v761 = vpop.permute.xlu0 %760
      %762 = vrot.lane.b32.xlu0 %v699, 16
      %v763 = vpop.permute.xlu0 %762
      %vm796 = vcmask 257152
      %797 = vst.msk [vmem:[#allocation2] sm:$0xf] %vm796, %v701
      %798 = vst.msk [vmem:[#allocation2 + $0x8] sm:$0xf] %vm796, %v703
      %799 = vst.msk [vmem:[#allocation2 + $0x10] sm:$0xf] %vm796, %v705
      %800 = vst.msk [vmem:[#allocation2 + $0x18] sm:$0xf] %vm796, %v707
      %801 = vst.msk [vmem:[#allocation2 + $0x20] sm:$0xf] %vm796, %v709
      %802 = vst.msk [vmem:[#allocation2 + $0x28] sm:$0xf] %vm796, %v711
      %803 = vst.msk [vmem:[#allocation2 + $0x30] sm:$0xf] %vm796, %v713
      %804 = vst.msk [vmem:[#allocation2 + $0x38] sm:$0xf] %vm796, %v715
      %805 = vst.msk [vmem:[#allocation2 + $0x40] sm:$0xf] %vm796, %v717
      %806 = vst.msk [vmem:[#allocation2 + $0x48] sm:$0xf] %vm796, %v719
      %807 = vst.msk [vmem:[#allocation2 + $0x50] sm:$0xf] %vm796, %v721
      %808 = vst.msk [vmem:[#allocation2 + $0x58] sm:$0xf] %vm796, %v723
      %809 = vst.msk [vmem:[#allocation2 + $0x60] sm:$0xf] %vm796, %v725
      %810 = vst.msk [vmem:[#allocation2 + $0x68] sm:$0xf] %vm796, %v727
      %811 = vst.msk [vmem:[#allocation2 + $0x70] sm:$0xf] %vm796, %v729
      %812 = vst.msk [vmem:[#allocation2 + $0x78] sm:$0xf] %vm796, %v731
      %813 = vst.msk [vmem:[#allocation2 + $0x80] sm:$0xf] %vm796, %v733
      %814 = vst.msk [vmem:[#allocation2 + $0x88] sm:$0xf] %vm796, %v735
      %815 = vst.msk [vmem:[#allocation2 + $0x90] sm:$0xf] %vm796, %v737
      %816 = vst.msk [vmem:[#allocation2 + $0x98] sm:$0xf] %vm796, %v739
      %817 = vst.msk [vmem:[#allocation2 + $0xa0] sm:$0xf] %vm796, %v741
      %818 = vst.msk [vmem:[#allocation2 + $0xa8] sm:$0xf] %vm796, %v743
      %819 = vst.msk [vmem:[#allocation2 + $0xb0] sm:$0xf] %vm796, %v745
      %820 = vst.msk [vmem:[#allocation2 + $0xb8] sm:$0xf] %vm796, %v747
      %821 = vst.msk [vmem:[#allocation2 + $0xc0] sm:$0xf] %vm796, %v749
      %822 = vst.msk [vmem:[#allocation2 + $0xc8] sm:$0xf] %vm796, %v751
      %823 = vst.msk [vmem:[#allocation2 + $0xd0] sm:$0xf] %vm796, %v753
      %824 = vst.msk [vmem:[#allocation2 + $0xd8] sm:$0xf] %vm796, %v755
      %825 = vst.msk [vmem:[#allocation2 + $0xe0] sm:$0xf] %vm796, %v757
      %826 = vst.msk [vmem:[#allocation2 + $0xe8] sm:$0xf] %vm796, %v759
      %827 = vst.msk [vmem:[#allocation2 + $0xf0] sm:$0xf] %vm796, %v761
      %828 = vst.msk [vmem:[#allocation2 + $0xf8] sm:$0xf] %vm796, %v763
      %vm877 = vcmask 1042432
      %vm878 = vcmask 1046532
      %vm879 = vmor %vm877, %vm878
      %v880 = vrot.slane %v226, 5
      %v881 = vrot.slane %v880, 4
      %v882 = vrot.slane %v227, 5
      %v883 = vsel %vm879, %v881, %v882
      %v884 = vrot.slane %v882, 4
      %v885 = vrot.slane %v228, 5
      %v886 = vsel %vm879, %v884, %v885
      %v887 = vrot.slane %v229, 5
      %v888 = vrot.slane %v887, 4
      %v889 = vrot.slane %v230, 5
      %v890 = vsel %vm879, %v888, %v889
      %v891 = vrot.slane %v889, 4
      %v892 = vrot.slane %v231, 5
      %v893 = vsel %vm879, %v891, %v892
      %v894 = vrot.slane %v232, 5
      %v895 = vrot.slane %v894, 4
      %v896 = vrot.slane %v233, 5
      %v897 = vsel %vm879, %v895, %v896
      %v898 = vrot.slane %v896, 4
      %v899 = vrot.slane %v234, 5
      %v900 = vsel %vm879, %v898, %v899
      %v901 = vrot.slane %v235, 5
      %v902 = vrot.slane %v901, 4
      %v903 = vrot.slane %v236, 5
      %v904 = vsel %vm879, %v902, %v903
      %v905 = vrot.slane %v903, 4
      %v906 = vrot.slane %v237, 5
      %v907 = vsel %vm879, %v905, %v906
      %v908 = vrot.slane %v238, 5
      %v909 = vrot.slane %v908, 4
      %v910 = vrot.slane %v239, 5
      %v911 = vsel %vm879, %v909, %v910
      %v912 = vrot.slane %v910, 4
      %v913 = vrot.slane %v240, 5
      %v914 = vsel %vm879, %v912, %v913
      %v915 = vrot.slane %v241, 5
      %v916 = vrot.slane %v915, 4
      %v917 = vrot.slane %v242, 5
      %v918 = vsel %vm879, %v916, %v917
      %v919 = vrot.slane %v917, 4
      %v920 = vrot.slane %v243, 5
      %v921 = vsel %vm879, %v919, %v920
      %v922 = vrot.slane %v244, 5
      %v923 = vrot.slane %v922, 4
      %v924 = vrot.slane %v245, 5
      %v925 = vsel %vm879, %v923, %v924
      %v926 = vrot.slane %v924, 4
      %v927 = vrot.slane %v246, 5
      %v928 = vsel %vm879, %v926, %v927
      %v929 = vrot.slane %v247, 5
      %v930 = vrot.slane %v929, 4
      %v931 = vrot.slane %v248, 5
      %v932 = vsel %vm879, %v930, %v931
      %v933 = vrot.slane %v931, 4
      %v934 = vrot.slane %v249, 5
      %v935 = vsel %vm879, %v933, %v934
      %v936 = vrot.slane %v250, 5
      %v937 = vrot.slane %v936, 4
      %v938 = vrot.slane %v251, 5
      %v939 = vsel %vm879, %v937, %v938
      %v940 = vrot.slane %v938, 4
      %v941 = vrot.slane %v252, 5
      %v942 = vsel %vm879, %v940, %v941
      %v943 = vrot.slane %v253, 5
      %v944 = vrot.slane %v943, 4
      %v945 = vrot.slane %v254, 5
      %v946 = vsel %vm879, %v944, %v945
      %v947 = vrot.slane %v945, 4
      %v948 = vrot.slane %v255, 5
      %v949 = vsel %vm879, %v947, %v948
      %v950 = vrot.slane %v256, 5
      %v951 = vrot.slane %v950, 4
      %v952 = vrot.slane %v257, 5
      %v953 = vsel %vm879, %v951, %v952
      %v954 = vrot.slane %v952, 4
      %v955 = vrot.slane %v258, 5
      %v956 = vsel %vm879, %v954, %v955
      %v957 = vrot.slane %v259, 5
      %v958 = vrot.slane %v957, 4
      %v959 = vrot.slane %v260, 5
      %v960 = vsel %vm879, %v958, %v959
      %v961 = vrot.slane %v959, 4
      %v962 = vrot.slane %v261, 5
      %v963 = vsel %vm879, %v961, %v962
      %v964 = vrot.slane %v262, 5
      %v965 = vrot.slane %v964, 4
      %v966 = vrot.slane %v263, 5
      %v967 = vsel %vm879, %v965, %v966
      %v968 = vrot.slane %v966, 4
      %v969 = vrot.slane %v264, 5
      %v970 = vsel %vm879, %v968, %v969
      %v971 = vrot.slane %v265, 5
      %v972 = vrot.slane %v971, 4
      %v973 = vrot.slane %v266, 5
      %v974 = vsel %vm879, %v972, %v973
      %v975 = vrot.slane %v973, 4
      %v976 = vrot.slane %v267, 5
      %v977 = vsel %vm879, %v975, %v976
      %v978 = vrot.slane %v268, 5
      %v979 = vrot.slane %v978, 4
      %v980 = vrot.slane %v269, 5
      %v981 = vsel %vm879, %v979, %v980
      %v982 = vrot.slane %v980, 4
      %v983 = vrot.slane %v270, 5
      %v984 = vsel %vm879, %v982, %v983
      %v985 = vrot.slane %v271, 5
      %v986 = vrot.slane %v985, 4
      %v987 = vrot.slane %v272, 5
      %v988 = vsel %vm879, %v986, %v987
      %v989 = vrot.slane %v987, 4
      %v990 = vrot.slane %v273, 5
      %v991 = vsel %vm879, %v989, %v990
      %992 = vrot.lane.b32.xlu0 %v883, 32
      %v993 = vpop.permute.xlu0 %992
      %994 = vrot.lane.b32.xlu0 %v886, 32
      %v995 = vpop.permute.xlu0 %994
      %996 = vrot.lane.b32.xlu0 %v890, 32
      %v997 = vpop.permute.xlu0 %996
      %998 = vrot.lane.b32.xlu0 %v893, 32
      %v999 = vpop.permute.xlu0 %998
      %1000 = vrot.lane.b32.xlu0 %v897, 32
      %v1001 = vpop.permute.xlu0 %1000
      %1002 = vrot.lane.b32.xlu0 %v900, 32
      %v1003 = vpop.permute.xlu0 %1002
      %1004 = vrot.lane.b32.xlu0 %v904, 32
      %v1005 = vpop.permute.xlu0 %1004
      %1006 = vrot.lane.b32.xlu0 %v907, 32
      %v1007 = vpop.permute.xlu0 %1006
      %1008 = vrot.lane.b32.xlu0 %v911, 32
      %v1009 = vpop.permute.xlu0 %1008
      %1010 = vrot.lane.b32.xlu0 %v914, 32
      %v1011 = vpop.permute.xlu0 %1010
      %1012 = vrot.lane.b32.xlu0 %v918, 32
      %v1013 = vpop.permute.xlu0 %1012
      %1014 = vrot.lane.b32.xlu0 %v921, 32
      %v1015 = vpop.permute.xlu0 %1014
      %1016 = vrot.lane.b32.xlu0 %v925, 32
      %v1017 = vpop.permute.xlu0 %1016
      %1018 = vrot.lane.b32.xlu0 %v928, 32
      %v1019 = vpop.permute.xlu0 %1018
      %1020 = vrot.lane.b32.xlu0 %v932, 32
      %v1021 = vpop.permute.xlu0 %1020
      %1022 = vrot.lane.b32.xlu0 %v935, 32
      %v1023 = vpop.permute.xlu0 %1022
      %1024 = vrot.lane.b32.xlu0 %v939, 32
      %v1025 = vpop.permute.xlu0 %1024
      %1026 = vrot.lane.b32.xlu0 %v942, 32
      %v1027 = vpop.permute.xlu0 %1026
      %1028 = vrot.lane.b32.xlu0 %v946, 32
      %v1029 = vpop.permute.xlu0 %1028
      %1030 = vrot.lane.b32.xlu0 %v949, 32
      %v1031 = vpop.permute.xlu0 %1030
      %1032 = vrot.lane.b32.xlu0 %v953, 32
      %v1033 = vpop.permute.xlu0 %1032
      %1034 = vrot.lane.b32.xlu0 %v956, 32
      %v1035 = vpop.permute.xlu0 %1034
      %1036 = vrot.lane.b32.xlu0 %v960, 32
      %v1037 = vpop.permute.xlu0 %1036
      %1038 = vrot.lane.b32.xlu0 %v963, 32
      %v1039 = vpop.permute.xlu0 %1038
      %1040 = vrot.lane.b32.xlu0 %v967, 32
      %v1041 = vpop.permute.xlu0 %1040
      %1042 = vrot.lane.b32.xlu0 %v970, 32
      %v1043 = vpop.permute.xlu0 %1042
      %1044 = vrot.lane.b32.xlu0 %v974, 32
      %v1045 = vpop.permute.xlu0 %1044
      %1046 = vrot.lane.b32.xlu0 %v977, 32
      %v1047 = vpop.permute.xlu0 %1046
      %1048 = vrot.lane.b32.xlu0 %v981, 32
      %v1049 = vpop.permute.xlu0 %1048
      %1050 = vrot.lane.b32.xlu0 %v984, 32
      %v1051 = vpop.permute.xlu0 %1050
      %1052 = vrot.lane.b32.xlu0 %v988, 32
      %v1053 = vpop.permute.xlu0 %1052
      %1054 = vrot.lane.b32.xlu0 %v991, 32
      %v1055 = vpop.permute.xlu0 %1054
      %vm1088 = vcmask 388352
      %1089 = vst.msk [vmem:[#allocation2] sm:$0xf] %vm1088, %v993
      %1090 = vst.msk [vmem:[#allocation2 + $0x8] sm:$0xf] %vm1088, %v995
      %1091 = vst.msk [vmem:[#allocation2 + $0x10] sm:$0xf] %vm1088, %v997
      %1092 = vst.msk [vmem:[#allocation2 + $0x18] sm:$0xf] %vm1088, %v999
      %1093 = vst.msk [vmem:[#allocation2 + $0x20] sm:$0xf] %vm1088, %v1001
      %1094 = vst.msk [vmem:[#allocation2 + $0x28] sm:$0xf] %vm1088, %v1003
      %1095 = vst.msk [vmem:[#allocation2 + $0x30] sm:$0xf] %vm1088, %v1005
      %1096 = vst.msk [vmem:[#allocation2 + $0x38] sm:$0xf] %vm1088, %v1007
      %1097 = vst.msk [vmem:[#allocation2 + $0x40] sm:$0xf] %vm1088, %v1009
      %1098 = vst.msk [vmem:[#allocation2 + $0x48] sm:$0xf] %vm1088, %v1011
      %1099 = vst.msk [vmem:[#allocation2 + $0x50] sm:$0xf] %vm1088, %v1013
      %1100 = vst.msk [vmem:[#allocation2 + $0x58] sm:$0xf] %vm1088, %v1015
      %1101 = vst.msk [vmem:[#allocation2 + $0x60] sm:$0xf] %vm1088, %v1017
      %1102 = vst.msk [vmem:[#allocation2 + $0x68] sm:$0xf] %vm1088, %v1019
      %1103 = vst.msk [vmem:[#allocation2 + $0x70] sm:$0xf] %vm1088, %v1021
      %1104 = vst.msk [vmem:[#allocation2 + $0x78] sm:$0xf] %vm1088, %v1023
      %1105 = vst.msk [vmem:[#allocation2 + $0x80] sm:$0xf] %vm1088, %v1025
      %1106 = vst.msk [vmem:[#allocation2 + $0x88] sm:$0xf] %vm1088, %v1027
      %1107 = vst.msk [vmem:[#allocation2 + $0x90] sm:$0xf] %vm1088, %v1029
      %1108 = vst.msk [vmem:[#allocation2 + $0x98] sm:$0xf] %vm1088, %v1031
      %1109 = vst.msk [vmem:[#allocation2 + $0xa0] sm:$0xf] %vm1088, %v1033
      %1110 = vst.msk [vmem:[#allocation2 + $0xa8] sm:$0xf] %vm1088, %v1035
      %1111 = vst.msk [vmem:[#allocation2 + $0xb0] sm:$0xf] %vm1088, %v1037
      %1112 = vst.msk [vmem:[#allocation2 + $0xb8] sm:$0xf] %vm1088, %v1039
      %1113 = vst.msk [vmem:[#allocation2 + $0xc0] sm:$0xf] %vm1088, %v1041
      %1114 = vst.msk [vmem:[#allocation2 + $0xc8] sm:$0xf] %vm1088, %v1043
      %1115 = vst.msk [vmem:[#allocation2 + $0xd0] sm:$0xf] %vm1088, %v1045
      %1116 = vst.msk [vmem:[#allocation2 + $0xd8] sm:$0xf] %vm1088, %v1047
      %1117 = vst.msk [vmem:[#allocation2 + $0xe0] sm:$0xf] %vm1088, %v1049
      %1118 = vst.msk [vmem:[#allocation2 + $0xe8] sm:$0xf] %vm1088, %v1051
      %1119 = vst.msk [vmem:[#allocation2 + $0xf0] sm:$0xf] %vm1088, %v1053
      %1120 = vst.msk [vmem:[#allocation2 + $0xf8] sm:$0xf] %vm1088, %v1055
      %1123 = vrot.lane.b32.xlu0 %v229, 48
      %v1124 = vpop.permute.xlu0 %1123
      %1125 = vrot.lane.b32.xlu0 %v230, 48
      %v1126 = vpop.permute.xlu0 %1125
      %1127 = vrot.lane.b32.xlu0 %v232, 48
      %v1128 = vpop.permute.xlu0 %1127
      %1129 = vrot.lane.b32.xlu0 %v233, 48
      %v1130 = vpop.permute.xlu0 %1129
      %1131 = vrot.lane.b32.xlu0 %v235, 48
      %v1132 = vpop.permute.xlu0 %1131
      %1133 = vrot.lane.b32.xlu0 %v236, 48
      %v1134 = vpop.permute.xlu0 %1133
      %1135 = vrot.lane.b32.xlu0 %v238, 48
      %v1136 = vpop.permute.xlu0 %1135
      %1137 = vrot.lane.b32.xlu0 %v239, 48
      %v1138 = vpop.permute.xlu0 %1137
      %1139 = vrot.lane.b32.xlu0 %v241, 48
      %v1140 = vpop.permute.xlu0 %1139
      %1141 = vrot.lane.b32.xlu0 %v242, 48
      %v1142 = vpop.permute.xlu0 %1141
      %1143 = vrot.lane.b32.xlu0 %v244, 48
      %v1144 = vpop.permute.xlu0 %1143
      %1145 = vrot.lane.b32.xlu0 %v245, 48
      %v1146 = vpop.permute.xlu0 %1145
      %1147 = vrot.lane.b32.xlu0 %v247, 48
      %v1148 = vpop.permute.xlu0 %1147
      %1149 = vrot.lane.b32.xlu0 %v248, 48
      %v1150 = vpop.permute.xlu0 %1149
      %1151 = vrot.lane.b32.xlu0 %v250, 48
      %v1152 = vpop.permute.xlu0 %1151
      %1153 = vrot.lane.b32.xlu0 %v251, 48
      %v1154 = vpop.permute.xlu0 %1153
      %1155 = vrot.lane.b32.xlu0 %v253, 48
      %v1156 = vpop.permute.xlu0 %1155
      %1157 = vrot.lane.b32.xlu0 %v254, 48
      %v1158 = vpop.permute.xlu0 %1157
      %1159 = vrot.lane.b32.xlu0 %v256, 48
      %v1160 = vpop.permute.xlu0 %1159
      %1161 = vrot.lane.b32.xlu0 %v257, 48
      %v1162 = vpop.permute.xlu0 %1161
      %1163 = vrot.lane.b32.xlu0 %v259, 48
      %v1164 = vpop.permute.xlu0 %1163
      %1165 = vrot.lane.b32.xlu0 %v260, 48
      %v1166 = vpop.permute.xlu0 %1165
      %1167 = vrot.lane.b32.xlu0 %v262, 48
      %v1168 = vpop.permute.xlu0 %1167
      %1169 = vrot.lane.b32.xlu0 %v263, 48
      %v1170 = vpop.permute.xlu0 %1169
      %1171 = vrot.lane.b32.xlu0 %v265, 48
      %v1172 = vpop.permute.xlu0 %1171
      %1173 = vrot.lane.b32.xlu0 %v266, 48
      %v1174 = vpop.permute.xlu0 %1173
      %1175 = vrot.lane.b32.xlu0 %v268, 48
      %v1176 = vpop.permute.xlu0 %1175
      %1177 = vrot.lane.b32.xlu0 %v269, 48
      %v1178 = vpop.permute.xlu0 %1177
      %1179 = vrot.lane.b32.xlu0 %v271, 48
      %v1180 = vpop.permute.xlu0 %1179
      %1181 = vrot.lane.b32.xlu0 %v272, 48
      %v1182 = vpop.permute.xlu0 %1181
      %1183 = vrot.lane.b32.xlu0 %v274, 48
      %v1184 = vpop.permute.xlu0 %1183
      %1185 = vrot.lane.b32.xlu0 %v275, 48
      %v1186 = vpop.permute.xlu0 %1185
      %vm1219 = vcmask 519552
      %1220 = vst.msk [vmem:[#allocation2] sm:$0xf] %vm1219, %v1124
      %1221 = vst.msk [vmem:[#allocation2 + $0x8] sm:$0xf] %vm1219, %v1126
      %1222 = vst.msk [vmem:[#allocation2 + $0x10] sm:$0xf] %vm1219, %v1128
      %1223 = vst.msk [vmem:[#allocation2 + $0x18] sm:$0xf] %vm1219, %v1130
      %1224 = vst.msk [vmem:[#allocation2 + $0x20] sm:$0xf] %vm1219, %v1132
      %1225 = vst.msk [vmem:[#allocation2 + $0x28] sm:$0xf] %vm1219, %v1134
      %1226 = vst.msk [vmem:[#allocation2 + $0x30] sm:$0xf] %vm1219, %v1136
      %1227 = vst.msk [vmem:[#allocation2 + $0x38] sm:$0xf] %vm1219, %v1138
      %1228 = vst.msk [vmem:[#allocation2 + $0x40] sm:$0xf] %vm1219, %v1140
      %1229 = vst.msk [vmem:[#allocation2 + $0x48] sm:$0xf] %vm1219, %v1142
      %1230 = vst.msk [vmem:[#allocation2 + $0x50] sm:$0xf] %vm1219, %v1144
      %1231 = vst.msk [vmem:[#allocation2 + $0x58] sm:$0xf] %vm1219, %v1146
      %1232 = vst.msk [vmem:[#allocation2 + $0x60] sm:$0xf] %vm1219, %v1148
      %1233 = vst.msk [vmem:[#allocation2 + $0x68] sm:$0xf] %vm1219, %v1150
      %1234 = vst.msk [vmem:[#allocation2 + $0x70] sm:$0xf] %vm1219, %v1152
      %1235 = vst.msk [vmem:[#allocation2 + $0x78] sm:$0xf] %vm1219, %v1154
      %1236 = vst.msk [vmem:[#allocation2 + $0x80] sm:$0xf] %vm1219, %v1156
      %1237 = vst.msk [vmem:[#allocation2 + $0x88] sm:$0xf] %vm1219, %v1158
      %1238 = vst.msk [vmem:[#allocation2 + $0x90] sm:$0xf] %vm1219, %v1160
      %1239 = vst.msk [vmem:[#allocation2 + $0x98] sm:$0xf] %vm1219, %v1162
      %1240 = vst.msk [vmem:[#allocation2 + $0xa0] sm:$0xf] %vm1219, %v1164
      %1241 = vst.msk [vmem:[#allocation2 + $0xa8] sm:$0xf] %vm1219, %v1166
      %1242 = vst.msk [vmem:[#allocation2 + $0xb0] sm:$0xf] %vm1219, %v1168
      %1243 = vst.msk [vmem:[#allocation2 + $0xb8] sm:$0xf] %vm1219, %v1170
      %1244 = vst.msk [vmem:[#allocation2 + $0xc0] sm:$0xf] %vm1219, %v1172
      %1245 = vst.msk [vmem:[#allocation2 + $0xc8] sm:$0xf] %vm1219, %v1174
      %1246 = vst.msk [vmem:[#allocation2 + $0xd0] sm:$0xf] %vm1219, %v1176
      %1247 = vst.msk [vmem:[#allocation2 + $0xd8] sm:$0xf] %vm1219, %v1178
      %1248 = vst.msk [vmem:[#allocation2 + $0xe0] sm:$0xf] %vm1219, %v1180
      %1249 = vst.msk [vmem:[#allocation2 + $0xe8] sm:$0xf] %vm1219, %v1182
      %1250 = vst.msk [vmem:[#allocation2 + $0xf0] sm:$0xf] %vm1219, %v1184
      %1251 = vst.msk [vmem:[#allocation2 + $0xf8] sm:$0xf] %vm1219, %v1186
      %v1253 = vshrl.u32 %v274, 16
      %v1255 = vrot.slane %v1253, 4
      %v1256 = vshll.u32 %v274, 16
      %v1258 = vrot.slane %v1256, 5
      %v1259 = vor.u32 %v1255, %v1258
      %v1260 = vrot.slane %v1259, 4
      %v1262 = vshll.u32 %v275, 16
      %v1264 = vrot.slane %v1262, 5
      %v1265 = vsel %vm315, %v1260, %v1264
      %v1266 = vshrl.u32 %v275, 16
      %v1268 = vrot.slane %v1266, 4
      %v1269 = vor.u32 %v1268, %v1264
      %v1270 = vrot.slane %v1269, 4
      %v1272 = vshll.u32 %v276, 16
      %v1274 = vrot.slane %v1272, 5
      %v1275 = vsel %vm315, %v1270, %v1274
      %1276 = vrot.lane.b32.xlu0 %v353, 64
      %v1277 = vpop.permute.xlu0 %1276
      %1278 = vrot.lane.b32.xlu0 %v363, 64
      %v1279 = vpop.permute.xlu0 %1278
      %1280 = vrot.lane.b32.xlu0 %v377, 64
      %v1281 = vpop.permute.xlu0 %1280
      %1282 = vrot.lane.b32.xlu0 %v387, 64
      %v1283 = vpop.permute.xlu0 %1282
      %1284 = vrot.lane.b32.xlu0 %v401, 64
      %v1285 = vpop.permute.xlu0 %1284
      %1286 = vrot.lane.b32.xlu0 %v411, 64
      %v1287 = vpop.permute.xlu0 %1286
      %1288 = vrot.lane.b32.xlu0 %v425, 64
      %v1289 = vpop.permute.xlu0 %1288
      %1290 = vrot.lane.b32.xlu0 %v435, 64
      %v1291 = vpop.permute.xlu0 %1290
      %1292 = vrot.lane.b32.xlu0 %v449, 64
      %v1293 = vpop.permute.xlu0 %1292
      %1294 = vrot.lane.b32.xlu0 %v459, 64
      %v1295 = vpop.permute.xlu0 %1294
      %1296 = vrot.lane.b32.xlu0 %v473, 64
      %v1297 = vpop.permute.xlu0 %1296
      %1298 = vrot.lane.b32.xlu0 %v483, 64
      %v1299 = vpop.permute.xlu0 %1298
      %1300 = vrot.lane.b32.xlu0 %v497, 64
      %v1301 = vpop.permute.xlu0 %1300
      %1302 = vrot.lane.b32.xlu0 %v507, 64
      %v1303 = vpop.permute.xlu0 %1302
      %1304 = vrot.lane.b32.xlu0 %v521, 64
      %v1305 = vpop.permute.xlu0 %1304
      %1306 = vrot.lane.b32.xlu0 %v531, 64
      %v1307 = vpop.permute.xlu0 %1306
      %1308 = vrot.lane.b32.xlu0 %v545, 64
      %v1309 = vpop.permute.xlu0 %1308
      %1310 = vrot.lane.b32.xlu0 %v555, 64
      %v1311 = vpop.permute.xlu0 %1310
      %1312 = vrot.lane.b32.xlu0 %v569, 64
      %v1313 = vpop.permute.xlu0 %1312
      %1314 = vrot.lane.b32.xlu0 %v579, 64
      %v1315 = vpop.permute.xlu0 %1314
      %1316 = vrot.lane.b32.xlu0 %v593, 64
      %v1317 = vpop.permute.xlu0 %1316
      %1318 = vrot.lane.b32.xlu0 %v603, 64
      %v1319 = vpop.permute.xlu0 %1318
      %1320 = vrot.lane.b32.xlu0 %v617, 64
      %v1321 = vpop.permute.xlu0 %1320
      %1322 = vrot.lane.b32.xlu0 %v627, 64
      %v1323 = vpop.permute.xlu0 %1322
      %1324 = vrot.lane.b32.xlu0 %v641, 64
      %v1325 = vpop.permute.xlu0 %1324
      %1326 = vrot.lane.b32.xlu0 %v651, 64
      %v1327 = vpop.permute.xlu0 %1326
      %1328 = vrot.lane.b32.xlu0 %v665, 64
      %v1329 = vpop.permute.xlu0 %1328
      %1330 = vrot.lane.b32.xlu0 %v675, 64
      %v1331 = vpop.permute.xlu0 %1330
      %1332 = vrot.lane.b32.xlu0 %v689, 64
      %v1333 = vpop.permute.xlu0 %1332
      %1334 = vrot.lane.b32.xlu0 %v699, 64
      %v1335 = vpop.permute.xlu0 %1334
      %1336 = vrot.lane.b32.xlu0 %v1265, 64
      %v1337 = vpop.permute.xlu0 %1336
      %1338 = vrot.lane.b32.xlu0 %v1275, 64
      %v1339 = vpop.permute.xlu0 %1338
      %vm1372 = vcmask 650752
      %1373 = vst.msk [vmem:[#allocation2] sm:$0xf] %vm1372, %v1277
      %1374 = vst.msk [vmem:[#allocation2 + $0x8] sm:$0xf] %vm1372, %v1279
      %1375 = vst.msk [vmem:[#allocation2 + $0x10] sm:$0xf] %vm1372, %v1281
      %1376 = vst.msk [vmem:[#allocation2 + $0x18] sm:$0xf] %vm1372, %v1283
      %1377 = vst.msk [vmem:[#allocation2 + $0x20] sm:$0xf] %vm1372, %v1285
      %1378 = vst.msk [vmem:[#allocation2 + $0x28] sm:$0xf] %vm1372, %v1287
      %1379 = vst.msk [vmem:[#allocation2 + $0x30] sm:$0xf] %vm1372, %v1289
      %1380 = vst.msk [vmem:[#allocation2 + $0x38] sm:$0xf] %vm1372, %v1291
      %1381 = vst.msk [vmem:[#allocation2 + $0x40] sm:$0xf] %vm1372, %v1293
      %1382 = vst.msk [vmem:[#allocation2 + $0x48] sm:$0xf] %vm1372, %v1295
      %1383 = vst.msk [vmem:[#allocation2 + $0x50] sm:$0xf] %vm1372, %v1297
      %1384 = vst.msk [vmem:[#allocation2 + $0x58] sm:$0xf] %vm1372, %v1299
      %1385 = vst.msk [vmem:[#allocation2 + $0x60] sm:$0xf] %vm1372, %v1301
      %1386 = vst.msk [vmem:[#allocation2 + $0x68] sm:$0xf] %vm1372, %v1303
      %1387 = vst.msk [vmem:[#allocation2 + $0x70] sm:$0xf] %vm1372, %v1305
      %1388 = vst.msk [vmem:[#allocation2 + $0x78] sm:$0xf] %vm1372, %v1307
      %1389 = vst.msk [vmem:[#allocation2 + $0x80] sm:$0xf] %vm1372, %v1309
      %1390 = vst.msk [vmem:[#allocation2 + $0x88] sm:$0xf] %vm1372, %v1311
      %1391 = vst.msk [vmem:[#allocation2 + $0x90] sm:$0xf] %vm1372, %v1313
      %1392 = vst.msk [vmem:[#allocation2 + $0x98] sm:$0xf] %vm1372, %v1315
      %1393 = vst.msk [vmem:[#allocation2 + $0xa0] sm:$0xf] %vm1372, %v1317
      %1394 = vst.msk [vmem:[#allocation2 + $0xa8] sm:$0xf] %vm1372, %v1319
      %1395 = vst.msk [vmem:[#allocation2 + $0xb0] sm:$0xf] %vm1372, %v1321
      %1396 = vst.msk [vmem:[#allocation2 + $0xb8] sm:$0xf] %vm1372, %v1323
      %1397 = vst.msk [vmem:[#allocation2 + $0xc0] sm:$0xf] %vm1372, %v1325
      %1398 = vst.msk [vmem:[#allocation2 + $0xc8] sm:$0xf] %vm1372, %v1327
      %1399 = vst.msk [vmem:[#allocation2 + $0xd0] sm:$0xf] %vm1372, %v1329
      %1400 = vst.msk [vmem:[#allocation2 + $0xd8] sm:$0xf] %vm1372, %v1331
      %1401 = vst.msk [vmem:[#allocation2 + $0xe0] sm:$0xf] %vm1372, %v1333
      %1402 = vst.msk [vmem:[#allocation2 + $0xe8] sm:$0xf] %vm1372, %v1335
      %1403 = vst.msk [vmem:[#allocation2 + $0xf0] sm:$0xf] %vm1372, %v1337
      %1404 = vst.msk [vmem:[#allocation2 + $0xf8] sm:$0xf] %vm1372, %v1339
      %v1406 = vrot.slane %v274, 5
      %v1407 = vrot.slane %v1406, 4
      %v1408 = vrot.slane %v275, 5
      %v1409 = vsel %vm879, %v1407, %v1408
      %v1410 = vrot.slane %v1408, 4
      %v1411 = vrot.slane %v276, 5
      %v1412 = vsel %vm879, %v1410, %v1411
      %1413 = vrot.lane.b32.xlu0 %v890, 80
      %v1414 = vpop.permute.xlu0 %1413
      %1415 = vrot.lane.b32.xlu0 %v893, 80
      %v1416 = vpop.permute.xlu0 %1415
      %1417 = vrot.lane.b32.xlu0 %v897, 80
      %v1418 = vpop.permute.xlu0 %1417
      %1419 = vrot.lane.b32.xlu0 %v900, 80
      %v1420 = vpop.permute.xlu0 %1419
      %1421 = vrot.lane.b32.xlu0 %v904, 80
      %v1422 = vpop.permute.xlu0 %1421
      %1423 = vrot.lane.b32.xlu0 %v907, 80
      %v1424 = vpop.permute.xlu0 %1423
      %1425 = vrot.lane.b32.xlu0 %v911, 80
      %v1426 = vpop.permute.xlu0 %1425
      %1427 = vrot.lane.b32.xlu0 %v914, 80
      %v1428 = vpop.permute.xlu0 %1427
      %1429 = vrot.lane.b32.xlu0 %v918, 80
      %v1430 = vpop.permute.xlu0 %1429
      %1431 = vrot.lane.b32.xlu0 %v921, 80
      %v1432 = vpop.permute.xlu0 %1431
      %1433 = vrot.lane.b32.xlu0 %v925, 80
      %v1434 = vpop.permute.xlu0 %1433
      %1435 = vrot.lane.b32.xlu0 %v928, 80
      %v1436 = vpop.permute.xlu0 %1435
      %1437 = vrot.lane.b32.xlu0 %v932, 80
      %v1438 = vpop.permute.xlu0 %1437
      %1439 = vrot.lane.b32.xlu0 %v935, 80
      %v1440 = vpop.permute.xlu0 %1439
      %1441 = vrot.lane.b32.xlu0 %v939, 80
      %v1442 = vpop.permute.xlu0 %1441
      %1443 = vrot.lane.b32.xlu0 %v942, 80
      %v1444 = vpop.permute.xlu0 %1443
      %1445 = vrot.lane.b32.xlu0 %v946, 80
      %v1446 = vpop.permute.xlu0 %1445
      %1447 = vrot.lane.b32.xlu0 %v949, 80
      %v1448 = vpop.permute.xlu0 %1447
      %1449 = vrot.lane.b32.xlu0 %v953, 80
      %v1450 = vpop.permute.xlu0 %1449
      %1451 = vrot.lane.b32.xlu0 %v956, 80
      %v1452 = vpop.permute.xlu0 %1451
      %1453 = vrot.lane.b32.xlu0 %v960, 80
      %v1454 = vpop.permute.xlu0 %1453
      %1455 = vrot.lane.b32.xlu0 %v963, 80
      %v1456 = vpop.permute.xlu0 %1455
      %1457 = vrot.lane.b32.xlu0 %v967, 80
      %v1458 = vpop.permute.xlu0 %1457
      %1459 = vrot.lane.b32.xlu0 %v970, 80
      %v1460 = vpop.permute.xlu0 %1459
      %1461 = vrot.lane.b32.xlu0 %v974, 80
      %v1462 = vpop.permute.xlu0 %1461
      %1463 = vrot.lane.b32.xlu0 %v977, 80
      %v1464 = vpop.permute.xlu0 %1463
      %1465 = vrot.lane.b32.xlu0 %v981, 80
      %v1466 = vpop.permute.xlu0 %1465
      %1467 = vrot.lane.b32.xlu0 %v984, 80
      %v1468 = vpop.permute.xlu0 %1467
      %1469 = vrot.lane.b32.xlu0 %v988, 80
      %v1470 = vpop.permute.xlu0 %1469
      %1471 = vrot.lane.b32.xlu0 %v991, 80
      %v1472 = vpop.permute.xlu0 %1471
      %1473 = vrot.lane.b32.xlu0 %v1409, 80
      %v1474 = vpop.permute.xlu0 %1473
      %1475 = vrot.lane.b32.xlu0 %v1412, 80
      %v1476 = vpop.permute.xlu0 %1475
      %vm1509 = vcmask 781952
      %1510 = vst.msk [vmem:[#allocation2] sm:$0xf] %vm1509, %v1414
      %1511 = vst.msk [vmem:[#allocation2 + $0x8] sm:$0xf] %vm1509, %v1416
      %1512 = vst.msk [vmem:[#allocation2 + $0x10] sm:$0xf] %vm1509, %v1418
      %1513 = vst.msk [vmem:[#allocation2 + $0x18] sm:$0xf] %vm1509, %v1420
      %1514 = vst.msk [vmem:[#allocation2 + $0x20] sm:$0xf] %vm1509, %v1422
      %1515 = vst.msk [vmem:[#allocation2 + $0x28] sm:$0xf] %vm1509, %v1424
      %1516 = vst.msk [vmem:[#allocation2 + $0x30] sm:$0xf] %vm1509, %v1426
      %1517 = vst.msk [vmem:[#allocation2 + $0x38] sm:$0xf] %vm1509, %v1428
      %1518 = vst.msk [vmem:[#allocation2 + $0x40] sm:$0xf] %vm1509, %v1430
      %1519 = vst.msk [vmem:[#allocation2 + $0x48] sm:$0xf] %vm1509, %v1432
      %1520 = vst.msk [vmem:[#allocation2 + $0x50] sm:$0xf] %vm1509, %v1434
      %1521 = vst.msk [vmem:[#allocation2 + $0x58] sm:$0xf] %vm1509, %v1436
      %1522 = vst.msk [vmem:[#allocation2 + $0x60] sm:$0xf] %vm1509, %v1438
      %1523 = vst.msk [vmem:[#allocation2 + $0x68] sm:$0xf] %vm1509, %v1440
      %1524 = vst.msk [vmem:[#allocation2 + $0x70] sm:$0xf] %vm1509, %v1442
      %1525 = vst.msk [vmem:[#allocation2 + $0x78] sm:$0xf] %vm1509, %v1444
      %1526 = vst.msk [vmem:[#allocation2 + $0x80] sm:$0xf] %vm1509, %v1446
      %1527 = vst.msk [vmem:[#allocation2 + $0x88] sm:$0xf] %vm1509, %v1448
      %1528 = vst.msk [vmem:[#allocation2 + $0x90] sm:$0xf] %vm1509, %v1450
      %1529 = vst.msk [vmem:[#allocation2 + $0x98] sm:$0xf] %vm1509, %v1452
      %1530 = vst.msk [vmem:[#allocation2 + $0xa0] sm:$0xf] %vm1509, %v1454
      %1531 = vst.msk [vmem:[#allocation2 + $0xa8] sm:$0xf] %vm1509, %v1456
      %1532 = vst.msk [vmem:[#allocation2 + $0xb0] sm:$0xf] %vm1509, %v1458
      %1533 = vst.msk [vmem:[#allocation2 + $0xb8] sm:$0xf] %vm1509, %v1460
      %1534 = vst.msk [vmem:[#allocation2 + $0xc0] sm:$0xf] %vm1509, %v1462
      %1535 = vst.msk [vmem:[#allocation2 + $0xc8] sm:$0xf] %vm1509, %v1464
      %1536 = vst.msk [vmem:[#allocation2 + $0xd0] sm:$0xf] %vm1509, %v1466
      %1537 = vst.msk [vmem:[#allocation2 + $0xd8] sm:$0xf] %vm1509, %v1468
      %1538 = vst.msk [vmem:[#allocation2 + $0xe0] sm:$0xf] %vm1509, %v1470
      %1539 = vst.msk [vmem:[#allocation2 + $0xe8] sm:$0xf] %vm1509, %v1472
      %1540 = vst.msk [vmem:[#allocation2 + $0xf0] sm:$0xf] %vm1509, %v1474
      %1541 = vst.msk [vmem:[#allocation2 + $0xf8] sm:$0xf] %vm1509, %v1476
      %1544 = vrot.lane.b32.xlu0 %v232, 96
      %v1545 = vpop.permute.xlu0 %1544
      %1546 = vrot.lane.b32.xlu0 %v233, 96
      %v1547 = vpop.permute.xlu0 %1546
      %1548 = vrot.lane.b32.xlu0 %v235, 96
      %v1549 = vpop.permute.xlu0 %1548
      %1550 = vrot.lane.b32.xlu0 %v236, 96
      %v1551 = vpop.permute.xlu0 %1550
      %1552 = vrot.lane.b32.xlu0 %v238, 96
      %v1553 = vpop.permute.xlu0 %1552
      %1554 = vrot.lane.b32.xlu0 %v239, 96
      %v1555 = vpop.permute.xlu0 %1554
      %1556 = vrot.lane.b32.xlu0 %v241, 96
      %v1557 = vpop.permute.xlu0 %1556
      %1558 = vrot.lane.b32.xlu0 %v242, 96
      %v1559 = vpop.permute.xlu0 %1558
      %1560 = vrot.lane.b32.xlu0 %v244, 96
      %v1561 = vpop.permute.xlu0 %1560
      %1562 = vrot.lane.b32.xlu0 %v245, 96
      %v1563 = vpop.permute.xlu0 %1562
      %1564 = vrot.lane.b32.xlu0 %v247, 96
      %v1565 = vpop.permute.xlu0 %1564
      %1566 = vrot.lane.b32.xlu0 %v248, 96
      %v1567 = vpop.permute.xlu0 %1566
      %1568 = vrot.lane.b32.xlu0 %v250, 96
      %v1569 = vpop.permute.xlu0 %1568
      %1570 = vrot.lane.b32.xlu0 %v251, 96
      %v1571 = vpop.permute.xlu0 %1570
      %1572 = vrot.lane.b32.xlu0 %v253, 96
      %v1573 = vpop.permute.xlu0 %1572
      %1574 = vrot.lane.b32.xlu0 %v254, 96
      %v1575 = vpop.permute.xlu0 %1574
      %1576 = vrot.lane.b32.xlu0 %v256, 96
      %v1577 = vpop.permute.xlu0 %1576
      %1578 = vrot.lane.b32.xlu0 %v257, 96
      %v1579 = vpop.permute.xlu0 %1578
      %1580 = vrot.lane.b32.xlu0 %v259, 96
      %v1581 = vpop.permute.xlu0 %1580
      %1582 = vrot.lane.b32.xlu0 %v260, 96
      %v1583 = vpop.permute.xlu0 %1582
      %1584 = vrot.lane.b32.xlu0 %v262, 96
      %v1585 = vpop.permute.xlu0 %1584
      %1586 = vrot.lane.b32.xlu0 %v263, 96
      %v1587 = vpop.permute.xlu0 %1586
      %1588 = vrot.lane.b32.xlu0 %v265, 96
      %v1589 = vpop.permute.xlu0 %1588
      %1590 = vrot.lane.b32.xlu0 %v266, 96
      %v1591 = vpop.permute.xlu0 %1590
      %1592 = vrot.lane.b32.xlu0 %v268, 96
      %v1593 = vpop.permute.xlu0 %1592
      %1594 = vrot.lane.b32.xlu0 %v269, 96
      %v1595 = vpop.permute.xlu0 %1594
      %1596 = vrot.lane.b32.xlu0 %v271, 96
      %v1597 = vpop.permute.xlu0 %1596
      %1598 = vrot.lane.b32.xlu0 %v272, 96
      %v1599 = vpop.permute.xlu0 %1598
      %1600 = vrot.lane.b32.xlu0 %v274, 96
      %v1601 = vpop.permute.xlu0 %1600
      %1602 = vrot.lane.b32.xlu0 %v275, 96
      %v1603 = vpop.permute.xlu0 %1602
      %1604 = vrot.lane.b32.xlu0 %v277, 96
      %v1605 = vpop.permute.xlu0 %1604
      %1606 = vrot.lane.b32.xlu0 %v278, 96
      %v1607 = vpop.permute.xlu0 %1606
      %vm1640 = vcmask 913152
      %1641 = vst.msk [vmem:[#allocation2] sm:$0xf] %vm1640, %v1545
      %1642 = vst.msk [vmem:[#allocation2 + $0x8] sm:$0xf] %vm1640, %v1547
      %1643 = vst.msk [vmem:[#allocation2 + $0x10] sm:$0xf] %vm1640, %v1549
      %1644 = vst.msk [vmem:[#allocation2 + $0x18] sm:$0xf] %vm1640, %v1551
      %1645 = vst.msk [vmem:[#allocation2 + $0x20] sm:$0xf] %vm1640, %v1553
      %1646 = vst.msk [vmem:[#allocation2 + $0x28] sm:$0xf] %vm1640, %v1555
      %1647 = vst.msk [vmem:[#allocation2 + $0x30] sm:$0xf] %vm1640, %v1557
      %1648 = vst.msk [vmem:[#allocation2 + $0x38] sm:$0xf] %vm1640, %v1559
      %1649 = vst.msk [vmem:[#allocation2 + $0x40] sm:$0xf] %vm1640, %v1561
      %1650 = vst.msk [vmem:[#allocation2 + $0x48] sm:$0xf] %vm1640, %v1563
      %1651 = vst.msk [vmem:[#allocation2 + $0x50] sm:$0xf] %vm1640, %v1565
      %1652 = vst.msk [vmem:[#allocation2 + $0x58] sm:$0xf] %vm1640, %v1567
      %1653 = vst.msk [vmem:[#allocation2 + $0x60] sm:$0xf] %vm1640, %v1569
      %1654 = vst.msk [vmem:[#allocation2 + $0x68] sm:$0xf] %vm1640, %v1571
      %1655 = vst.msk [vmem:[#allocation2 + $0x70] sm:$0xf] %vm1640, %v1573
      %1656 = vst.msk [vmem:[#allocation2 + $0x78] sm:$0xf] %vm1640, %v1575
      %1657 = vst.msk [vmem:[#allocation2 + $0x80] sm:$0xf] %vm1640, %v1577
      %1658 = vst.msk [vmem:[#allocation2 + $0x88] sm:$0xf] %vm1640, %v1579
      %1659 = vst.msk [vmem:[#allocation2 + $0x90] sm:$0xf] %vm1640, %v1581
      %1660 = vst.msk [vmem:[#allocation2 + $0x98] sm:$0xf] %vm1640, %v1583
      %1661 = vst.msk [vmem:[#allocation2 + $0xa0] sm:$0xf] %vm1640, %v1585
      %1662 = vst.msk [vmem:[#allocation2 + $0xa8] sm:$0xf] %vm1640, %v1587
      %1663 = vst.msk [vmem:[#allocation2 + $0xb0] sm:$0xf] %vm1640, %v1589
      %1664 = vst.msk [vmem:[#allocation2 + $0xb8] sm:$0xf] %vm1640, %v1591
      %1665 = vst.msk [vmem:[#allocation2 + $0xc0] sm:$0xf] %vm1640, %v1593
      %1666 = vst.msk [vmem:[#allocation2 + $0xc8] sm:$0xf] %vm1640, %v1595
      %1667 = vst.msk [vmem:[#allocation2 + $0xd0] sm:$0xf] %vm1640, %v1597
      %1668 = vst.msk [vmem:[#allocation2 + $0xd8] sm:$0xf] %vm1640, %v1599
      %1669 = vst.msk [vmem:[#allocation2 + $0xe0] sm:$0xf] %vm1640, %v1601
      %1670 = vst.msk [vmem:[#allocation2 + $0xe8] sm:$0xf] %vm1640, %v1603
      %1671 = vst.msk [vmem:[#allocation2 + $0xf0] sm:$0xf] %vm1640, %v1605
      %1672 = vst.msk [vmem:[#allocation2 + $0xf8] sm:$0xf] %vm1640, %v1607
      %v1674 = vshrl.u32 %v277, 16
      %v1676 = vrot.slane %v1674, 4
      %v1677 = vshll.u32 %v277, 16
      %v1679 = vrot.slane %v1677, 5
      %v1680 = vor.u32 %v1676, %v1679
      %v1681 = vrot.slane %v1680, 4
      %v1683 = vshll.u32 %v278, 16
      %v1685 = vrot.slane %v1683, 5
      %v1686 = vsel %vm315, %v1681, %v1685
      %v1687 = vshrl.u32 %v278, 16
      %v1689 = vrot.slane %v1687, 4
      %v1690 = vor.u32 %v1689, %v1685
      %v1691 = vrot.slane %v1690, 4
      %v1693 = vshll.u32 %v279, 16
      %v1695 = vrot.slane %v1693, 5
      %v1696 = vsel %vm315, %v1691, %v1695
      %1697 = vrot.lane.b32.xlu0 %v377, 112
      %v1698 = vpop.permute.xlu0 %1697
      %1699 = vrot.lane.b32.xlu0 %v387, 112
      %v1700 = vpop.permute.xlu0 %1699
      %1701 = vrot.lane.b32.xlu0 %v401, 112
      %v1702 = vpop.permute.xlu0 %1701
      %1703 = vrot.lane.b32.xlu0 %v411, 112
      %v1704 = vpop.permute.xlu0 %1703
      %1705 = vrot.lane.b32.xlu0 %v425, 112
      %v1706 = vpop.permute.xlu0 %1705
      %1707 = vrot.lane.b32.xlu0 %v435, 112
      %v1708 = vpop.permute.xlu0 %1707
      %1709 = vrot.lane.b32.xlu0 %v449, 112
      %v1710 = vpop.permute.xlu0 %1709
      %1711 = vrot.lane.b32.xlu0 %v459, 112
      %v1712 = vpop.permute.xlu0 %1711
      %1713 = vrot.lane.b32.xlu0 %v473, 112
      %v1714 = vpop.permute.xlu0 %1713
      %1715 = vrot.lane.b32.xlu0 %v483, 112
      %v1716 = vpop.permute.xlu0 %1715
      %1717 = vrot.lane.b32.xlu0 %v497, 112
      %v1718 = vpop.permute.xlu0 %1717
      %1719 = vrot.lane.b32.xlu0 %v507, 112
      %v1720 = vpop.permute.xlu0 %1719
      %1721 = vrot.lane.b32.xlu0 %v521, 112
      %v1722 = vpop.permute.xlu0 %1721
      %1723 = vrot.lane.b32.xlu0 %v531, 112
      %v1724 = vpop.permute.xlu0 %1723
      %1725 = vrot.lane.b32.xlu0 %v545, 112
      %v1726 = vpop.permute.xlu0 %1725
      %1727 = vrot.lane.b32.xlu0 %v555, 112
      %v1728 = vpop.permute.xlu0 %1727
      %1729 = vrot.lane.b32.xlu0 %v569, 112
      %v1730 = vpop.permute.xlu0 %1729
      %1731 = vrot.lane.b32.xlu0 %v579, 112
      %v1732 = vpop.permute.xlu0 %1731
      %1733 = vrot.lane.b32.xlu0 %v593, 112
      %v1734 = vpop.permute.xlu0 %1733
      %1735 = vrot.lane.b32.xlu0 %v603, 112
      %v1736 = vpop.permute.xlu0 %1735
      %1737 = vrot.lane.b32.xlu0 %v617, 112
      %v1738 = vpop.permute.xlu0 %1737
      %1739 = vrot.lane.b32.xlu0 %v627, 112
      %v1740 = vpop.permute.xlu0 %1739
      %1741 = vrot.lane.b32.xlu0 %v641, 112
      %v1742 = vpop.permute.xlu0 %1741
      %1743 = vrot.lane.b32.xlu0 %v651, 112
      %v1744 = vpop.permute.xlu0 %1743
      %1745 = vrot.lane.b32.xlu0 %v665, 112
      %v1746 = vpop.permute.xlu0 %1745
      %1747 = vrot.lane.b32.xlu0 %v675, 112
      %v1748 = vpop.permute.xlu0 %1747
      %1749 = vrot.lane.b32.xlu0 %v689, 112
      %v1750 = vpop.permute.xlu0 %1749
      %1751 = vrot.lane.b32.xlu0 %v699, 112
      %v1752 = vpop.permute.xlu0 %1751
      %1753 = vrot.lane.b32.xlu0 %v1265, 112
      %v1754 = vpop.permute.xlu0 %1753
      %1755 = vrot.lane.b32.xlu0 %v1275, 112
      %v1756 = vpop.permute.xlu0 %1755
      %1757 = vrot.lane.b32.xlu0 %v1686, 112
      %v1758 = vpop.permute.xlu0 %1757
      %1759 = vrot.lane.b32.xlu0 %v1696, 112
      %v1760 = vpop.permute.xlu0 %1759
      %vm1793 = vcmask 1044352
      %1794 = vst.msk [vmem:[#allocation2] sm:$0xf] %vm1793, %v1698
      %1795 = vst.msk [vmem:[#allocation2 + $0x8] sm:$0xf] %vm1793, %v1700
      %1796 = vst.msk [vmem:[#allocation2 + $0x10] sm:$0xf] %vm1793, %v1702
      %1797 = vst.msk [vmem:[#allocation2 + $0x18] sm:$0xf] %vm1793, %v1704
      %1798 = vst.msk [vmem:[#allocation2 + $0x20] sm:$0xf] %vm1793, %v1706
      %1799 = vst.msk [vmem:[#allocation2 + $0x28] sm:$0xf] %vm1793, %v1708
      %1800 = vst.msk [vmem:[#allocation2 + $0x30] sm:$0xf] %vm1793, %v1710
      %1801 = vst.msk [vmem:[#allocation2 + $0x38] sm:$0xf] %vm1793, %v1712
      %1802 = vst.msk [vmem:[#allocation2 + $0x40] sm:$0xf] %vm1793, %v1714
      %1803 = vst.msk [vmem:[#allocation2 + $0x48] sm:$0xf] %vm1793, %v1716
      %1804 = vst.msk [vmem:[#allocation2 + $0x50] sm:$0xf] %vm1793, %v1718
      %1805 = vst.msk [vmem:[#allocation2 + $0x58] sm:$0xf] %vm1793, %v1720
      %1806 = vst.msk [vmem:[#allocation2 + $0x60] sm:$0xf] %vm1793, %v1722
      %1807 = vst.msk [vmem:[#allocation2 + $0x68] sm:$0xf] %vm1793, %v1724
      %1808 = vst.msk [vmem:[#allocation2 + $0x70] sm:$0xf] %vm1793, %v1726
      %1809 = vst.msk [vmem:[#allocation2 + $0x78] sm:$0xf] %vm1793, %v1728
      %1810 = vst.msk [vmem:[#allocation2 + $0x80] sm:$0xf] %vm1793, %v1730
      %1811 = vst.msk [vmem:[#allocation2 + $0x88] sm:$0xf] %vm1793, %v1732
      %1812 = vst.msk [vmem:[#allocation2 + $0x90] sm:$0xf] %vm1793, %v1734
      %1813 = vst.msk [vmem:[#allocation2 + $0x98] sm:$0xf] %vm1793, %v1736
      %1814 = vst.msk [vmem:[#allocation2 + $0xa0] sm:$0xf] %vm1793, %v1738
      %1815 = vst.msk [vmem:[#allocation2 + $0xa8] sm:$0xf] %vm1793, %v1740
      %1816 = vst.msk [vmem:[#allocation2 + $0xb0] sm:$0xf] %vm1793, %v1742
      %1817 = vst.msk [vmem:[#allocation2 + $0xb8] sm:$0xf] %vm1793, %v1744
      %1818 = vst.msk [vmem:[#allocation2 + $0xc0] sm:$0xf] %vm1793, %v1746
      %1819 = vst.msk [vmem:[#allocation2 + $0xc8] sm:$0xf] %vm1793, %v1748
      %1820 = vst.msk [vmem:[#allocation2 + $0xd0] sm:$0xf] %vm1793, %v1750
      %1821 = vst.msk [vmem:[#allocation2 + $0xd8] sm:$0xf] %vm1793, %v1752
      %1822 = vst.msk [vmem:[#allocation2 + $0xe0] sm:$0xf] %vm1793, %v1754
      %1823 = vst.msk [vmem:[#allocation2 + $0xe8] sm:$0xf] %vm1793, %v1756
      %1824 = vst.msk [vmem:[#allocation2 + $0xf0] sm:$0xf] %vm1793, %v1758
      %1825 = vst.msk [vmem:[#allocation2 + $0xf8] sm:$0xf] %vm1793, %v1760
      %v1827 = vrot.slane %v277, 5
      %v1828 = vrot.slane %v1827, 4
      %v1829 = vrot.slane %v278, 5
      %v1830 = vsel %vm879, %v1828, %v1829
      %v1831 = vrot.slane %v1829, 4
      %v1832 = vrot.slane %v279, 5
      %v1833 = vsel %vm879, %v1831, %v1832
      %1866 = vst.msk [vmem:[#allocation2 + $0x4] sm:$0xf] %vm280, %v897
      %1867 = vst.msk [vmem:[#allocation2 + $0xc] sm:$0xf] %vm280, %v900
      %1868 = vst.msk [vmem:[#allocation2 + $0x14] sm:$0xf] %vm280, %v904
      %1869 = vst.msk [vmem:[#allocation2 + $0x1c] sm:$0xf] %vm280, %v907
      %1870 = vst.msk [vmem:[#allocation2 + $0x24] sm:$0xf] %vm280, %v911
      %1871 = vst.msk [vmem:[#allocation2 + $0x2c] sm:$0xf] %vm280, %v914
      %1872 = vst.msk [vmem:[#allocation2 + $0x34] sm:$0xf] %vm280, %v918
      %1873 = vst.msk [vmem:[#allocation2 + $0x3c] sm:$0xf] %vm280, %v921
      %1874 = vst.msk [vmem:[#allocation2 + $0x44] sm:$0xf] %vm280, %v925
      %1875 = vst.msk [vmem:[#allocation2 + $0x4c] sm:$0xf] %vm280, %v928
      %1876 = vst.msk [vmem:[#allocation2 + $0x54] sm:$0xf] %vm280, %v932
      %1877 = vst.msk [vmem:[#allocation2 + $0x5c] sm:$0xf] %vm280, %v935
      %1878 = vst.msk [vmem:[#allocation2 + $0x64] sm:$0xf] %vm280, %v939
      %1879 = vst.msk [vmem:[#allocation2 + $0x6c] sm:$0xf] %vm280, %v942
      %1880 = vst.msk [vmem:[#allocation2 + $0x74] sm:$0xf] %vm280, %v946
      %1881 = vst.msk [vmem:[#allocation2 + $0x7c] sm:$0xf] %vm280, %v949
      %1882 = vst.msk [vmem:[#allocation2 + $0x84] sm:$0xf] %vm280, %v953
      %1883 = vst.msk [vmem:[#allocation2 + $0x8c] sm:$0xf] %vm280, %v956
      %1884 = vst.msk [vmem:[#allocation2 + $0x94] sm:$0xf] %vm280, %v960
      %1885 = vst.msk [vmem:[#allocation2 + $0x9c] sm:$0xf] %vm280, %v963
      %1886 = vst.msk [vmem:[#allocation2 + $0xa4] sm:$0xf] %vm280, %v967
      %1887 = vst.msk [vmem:[#allocation2 + $0xac] sm:$0xf] %vm280, %v970
      %1888 = vst.msk [vmem:[#allocation2 + $0xb4] sm:$0xf] %vm280, %v974
      %1889 = vst.msk [vmem:[#allocation2 + $0xbc] sm:$0xf] %vm280, %v977
      %1890 = vst.msk [vmem:[#allocation2 + $0xc4] sm:$0xf] %vm280, %v981
      %1891 = vst.msk [vmem:[#allocation2 + $0xcc] sm:$0xf] %vm280, %v984
      %1892 = vst.msk [vmem:[#allocation2 + $0xd4] sm:$0xf] %vm280, %v988
      %1893 = vst.msk [vmem:[#allocation2 + $0xdc] sm:$0xf] %vm280, %v991
      %1894 = vst.msk [vmem:[#allocation2 + $0xe4] sm:$0xf] %vm280, %v1409
      %1895 = vst.msk [vmem:[#allocation2 + $0xec] sm:$0xf] %vm280, %v1412
      %1896 = vst.msk [vmem:[#allocation2 + $0xf4] sm:$0xf] %vm280, %v1830
      %1897 = vst.msk [vmem:[#allocation2 + $0xfc] sm:$0xf] %vm280, %v1833
      %v1898 = vld [vmem:[#allocation2] sm:$0xff]
      %v1899 = vld [vmem:[#allocation2 + $0x8] sm:$0xff]
      %v1900 = vld [vmem:[#allocation2 + $0x10] sm:$0xff]
      %v1901 = vld [vmem:[#allocation2 + $0x18] sm:$0xff]
      %v1902 = vld [vmem:[#allocation2 + $0x20] sm:$0xff]
      %v1903 = vld [vmem:[#allocation2 + $0x28] sm:$0xff]
      %v1904 = vld [vmem:[#allocation2 + $0x30] sm:$0xff]
      %v1905 = vld [vmem:[#allocation2 + $0x38] sm:$0xff]
      %v1906 = vld [vmem:[#allocation2 + $0x40] sm:$0xff]
      %v1907 = vld [vmem:[#allocation2 + $0x48] sm:$0xff]
      %v1908 = vld [vmem:[#allocation2 + $0x50] sm:$0xff]
      %v1909 = vld [vmem:[#allocation2 + $0x58] sm:$0xff]
      %v1910 = vld [vmem:[#allocation2 + $0x60] sm:$0xff]
      %v1911 = vld [vmem:[#allocation2 + $0x68] sm:$0xff]
      %v1912 = vld [vmem:[#allocation2 + $0x70] sm:$0xff]
      %v1913 = vld [vmem:[#allocation2 + $0x78] sm:$0xff]
      %v1914 = vld [vmem:[#allocation2 + $0x80] sm:$0xff]
      %v1915 = vld [vmem:[#allocation2 + $0x88] sm:$0xff]
      %v1916 = vld [vmem:[#allocation2 + $0x90] sm:$0xff]
      %v1917 = vld [vmem:[#allocation2 + $0x98] sm:$0xff]
      %v1918 = vld [vmem:[#allocation2 + $0xa0] sm:$0xff]
      %v1919 = vld [vmem:[#allocation2 + $0xa8] sm:$0xff]
      %v1920 = vld [vmem:[#allocation2 + $0xb0] sm:$0xff]
      %v1921 = vld [vmem:[#allocation2 + $0xb8] sm:$0xff]
      %v1922 = vld [vmem:[#allocation2 + $0xc0] sm:$0xff]
      %v1923 = vld [vmem:[#allocation2 + $0xc8] sm:$0xff]
      %v1924 = vld [vmem:[#allocation2 + $0xd0] sm:$0xff]
      %v1925 = vld [vmem:[#allocation2 + $0xd8] sm:$0xff]
      %v1926 = vld [vmem:[#allocation2 + $0xe0] sm:$0xff]
      %v1927 = vld [vmem:[#allocation2 + $0xe8] sm:$0xff]
      %v1928 = vld [vmem:[#allocation2 + $0xf0] sm:$0xff]
      %v1929 = vld [vmem:[#allocation2 + $0xf8] sm:$0xff]
      %v1930 = vld [vmem:[%s1] sm:$0xf]
      %v1931 = vld [vmem:[%s1 + $0x4] sm:$0xf]
      %v1932 = vld [vmem:[%s1 + $0x8] sm:$0xf]
      %v1933 = vld [vmem:[%s1 + $0xc] sm:$0xf]
      %v1934 = vld [vmem:[%s1 + $0x10] sm:$0xf]
      %v1935 = vld [vmem:[%s1 + $0x14] sm:$0xf]
      %v1936 = vld [vmem:[%s1 + $0x18] sm:$0xf]
      %v1937 = vld [vmem:[%s1 + $0x1c] sm:$0xf]
      %v1938 = vld [vmem:[%s1 + $0x20] sm:$0xf]
      %v1939 = vld [vmem:[%s1 + $0x24] sm:$0xf]
      %v1940 = vld [vmem:[%s1 + $0x28] sm:$0xf]
      %v1941 = vld [vmem:[%s1 + $0x2c] sm:$0xf]
      %v1942 = vld [vmem:[%s1 + $0x30] sm:$0xf]
      %v1943 = vld [vmem:[%s1 + $0x34] sm:$0xf]
      %v1944 = vld [vmem:[%s1 + $0x38] sm:$0xf]
      %v1945 = vld [vmem:[%s1 + $0x3c] sm:$0xf]
      %v1946 = vld [vmem:[%s1 + $0x40] sm:$0xf]
      %v1947 = vld [vmem:[%s1 + $0x44] sm:$0xf]
      %v1948 = vld [vmem:[%s2] sm:$0x1]
      %v1950 = vlaneseq
      %v1951 = vshrl.u32 %v1950, 7
      %v1952 = vsub.s32 0, %v1951
      %v1953 = vrot.slane %v1948, %v1952
      %v1987 = vunpack.c.l.b16 %v1898
      %v1988 = vunpack.c.h.b16 %v1898
      %v1989 = vunpack.c.l.b16 %v1899
      %v1990 = vunpack.c.h.b16 %v1899
      %v1991 = vunpack.c.l.b16 %v1900
      %v1992 = vunpack.c.h.b16 %v1900
      %v1993 = vunpack.c.l.b16 %v1901
      %v1994 = vunpack.c.h.b16 %v1901
      %v1995 = vunpack.c.l.b16 %v1902
      %v1996 = vunpack.c.h.b16 %v1902
      %v1997 = vunpack.c.l.b16 %v1903
      %v1998 = vunpack.c.h.b16 %v1903
      %v1999 = vunpack.c.l.b16 %v1904
      %v2000 = vunpack.c.h.b16 %v1904
      %v2001 = vunpack.c.l.b16 %v1905
      %v2002 = vunpack.c.h.b16 %v1905
      %v2003 = vunpack.c.l.b16 %v1906
      %v2004 = vunpack.c.h.b16 %v1906
      %v2005 = vunpack.c.l.b16 %v1907
      %v2006 = vunpack.c.h.b16 %v1907
      %v2007 = vunpack.c.l.b16 %v1908
      %v2008 = vunpack.c.h.b16 %v1908
      %v2009 = vunpack.c.l.b16 %v1909
      %v2010 = vunpack.c.h.b16 %v1909
      %v2011 = vunpack.c.l.b16 %v1910
      %v2012 = vunpack.c.h.b16 %v1910
      %v2013 = vunpack.c.l.b16 %v1911
      %v2014 = vunpack.c.h.b16 %v1911
      %v2015 = vunpack.c.l.b16 %v1912
      %v2016 = vunpack.c.h.b16 %v1912
      %v2017 = vunpack.c.l.b16 %v1913
      %v2018 = vunpack.c.h.b16 %v1913
      %v2019 = vunpack.c.l.b16 %v1914
      %v2020 = vunpack.c.h.b16 %v1914
      %v2021 = vunpack.c.l.b16 %v1915
      %v2022 = vunpack.c.h.b16 %v1915
      %v2023 = vunpack.c.l.b16 %v1916
      %v2024 = vunpack.c.h.b16 %v1916
      %v2025 = vunpack.c.l.b16 %v1917
      %v2026 = vunpack.c.h.b16 %v1917
      %v2027 = vunpack.c.l.b16 %v1918
      %v2028 = vunpack.c.h.b16 %v1918
      %v2029 = vunpack.c.l.b16 %v1919
      %v2030 = vunpack.c.h.b16 %v1919
      %v2031 = vunpack.c.l.b16 %v1920
      %v2032 = vunpack.c.h.b16 %v1920
      %v2033 = vunpack.c.l.b16 %v1921
      %v2034 = vunpack.c.h.b16 %v1921
      %v2035 = vunpack.c.l.b16 %v1922
      %v2036 = vunpack.c.h.b16 %v1922
      %v2037 = vunpack.c.l.b16 %v1923
      %v2038 = vunpack.c.h.b16 %v1923
      %v2039 = vunpack.c.l.b16 %v1924
      %v2040 = vunpack.c.h.b16 %v1924
      %v2041 = vunpack.c.l.b16 %v1925
      %v2042 = vunpack.c.h.b16 %v1925
      %v2043 = vunpack.c.l.b16 %v1926
      %v2044 = vunpack.c.h.b16 %v1926
      %v2045 = vunpack.c.l.b16 %v1927
      %v2046 = vunpack.c.h.b16 %v1927
      %v2047 = vunpack.c.l.b16 %v1928
      %v2048 = vunpack.c.h.b16 %v1928
      %v2049 = vunpack.c.l.b16 %v1929
      %v2050 = vunpack.c.h.b16 %v1929
      %v2051 = vpack.c.b16 %v1989, %v1987
      %v2052 = vpack.c.b16 %v1990, %v1988
      %v2053 = vpack.c.b16 %v1993, %v1991
      %v2054 = vpack.c.b16 %v1994, %v1992
      %v2055 = vpack.c.b16 %v1997, %v1995
      %v2056 = vpack.c.b16 %v1998, %v1996
      %v2057 = vpack.c.b16 %v2001, %v1999
      %v2058 = vpack.c.b16 %v2002, %v2000
      %v2059 = vpack.c.b16 %v2005, %v2003
      %v2060 = vpack.c.b16 %v2006, %v2004
      %v2061 = vpack.c.b16 %v2009, %v2007
      %v2062 = vpack.c.b16 %v2010, %v2008
      %v2063 = vpack.c.b16 %v2013, %v2011
      %v2064 = vpack.c.b16 %v2014, %v2012
      %v2065 = vpack.c.b16 %v2017, %v2015
      %v2066 = vpack.c.b16 %v2018, %v2016
      %v2067 = vpack.c.b16 %v2021, %v2019
      %v2068 = vpack.c.b16 %v2022, %v2020
      %v2069 = vpack.c.b16 %v2025, %v2023
      %v2070 = vpack.c.b16 %v2026, %v2024
      %v2071 = vpack.c.b16 %v2029, %v2027
      %v2072 = vpack.c.b16 %v2030, %v2028
      %v2073 = vpack.c.b16 %v2033, %v2031
      %v2074 = vpack.c.b16 %v2034, %v2032
      %v2075 = vpack.c.b16 %v2037, %v2035
      %v2076 = vpack.c.b16 %v2038, %v2036
      %v2077 = vpack.c.b16 %v2041, %v2039
      %v2078 = vpack.c.b16 %v2042, %v2040
      %v2079 = vpack.c.b16 %v2045, %v2043
      %v2080 = vpack.c.b16 %v2046, %v2044
      %v2081 = vpack.c.b16 %v2049, %v2047
      %v2082 = vpack.c.b16 %v2050, %v2048
      %v2117 = vunpack.c.l.b16 %v1930
      %v2118 = vunpack.c.l.b16 %v1931
      %v2119 = vunpack.c.l.b16 %v1932
      %v2120 = vunpack.c.l.b16 %v1933
      %v2121 = vunpack.c.l.b16 %v1934
      %v2122 = vunpack.c.l.b16 %v1935
      %v2123 = vunpack.c.l.b16 %v1936
      %v2124 = vunpack.c.l.b16 %v1937
      %v2125 = vunpack.c.l.b16 %v1938
      %v2126 = vunpack.c.l.b16 %v1939
      %v2127 = vunpack.c.l.b16 %v1940
      %v2128 = vunpack.c.l.b16 %v1941
      %v2129 = vunpack.c.l.b16 %v1942
      %v2130 = vunpack.c.l.b16 %v1943
      %v2131 = vunpack.c.l.b16 %v1944
      %v2132 = vunpack.c.l.b16 %v1945
      %v2133 = vunpack.c.l.b16 %v1946
      %v2134 = vunpack.c.l.b16 %v1947
      %v2135 = vpack.c.b16 %v2118, %v2117
      %v2136 = vpack.c.b16 %v2120, %v2119
      %v2137 = vpack.c.b16 %v2122, %v2121
      %v2138 = vpack.c.b16 %v2124, %v2123
      %v2139 = vpack.c.b16 %v2126, %v2125
      %v2140 = vpack.c.b16 %v2128, %v2127
      %v2141 = vpack.c.b16 %v2130, %v2129
      %v2142 = vpack.c.b16 %v2132, %v2131
      %v2143 = vpack.c.b16 %v2134, %v2133
      %vm2153 = vcmask 130048
      %v2155 = vsel %vm2153, %v2052, 0
      %v2158 = vsel %vm2153, %v2054, 0
      %v2161 = vsel %vm2153, %v2056, 0
      %v2164 = vsel %vm2153, %v2058, 0
      %v2167 = vsel %vm2153, %v2060, 0
      %v2170 = vsel %vm2153, %v2062, 0
      %v2173 = vsel %vm2153, %v2064, 0
      %v2176 = vsel %vm2153, %v2066, 0
      %v2179 = vsel %vm2153, %v2068, 0
      %v2182 = vsel %vm2153, %v2070, 0
      %v2185 = vsel %vm2153, %v2072, 0
      %v2188 = vsel %vm2153, %v2074, 0
      %v2191 = vsel %vm2153, %v2076, 0
      %v2194 = vsel %vm2153, %v2078, 0
      %v2197 = vsel %vm2153, %v2080, 0
      %v2200 = vsel %vm2153, %v2082, 0
      %2202 = vmatprep.subr.bf16.mxu0 0
      %2203 = vmatpush1.bf16.msra.mxu0 %v2142
      %2204 = vmatprep.subr.bf16.mxu0 0
      %2205 = vmatpush1.bf16.msra.mxu0 %v2141
      %2206 = vmatprep.subr.bf16.mxu0 0
      %2207 = vmatpush1.bf16.msra.mxu0 %v2140
      %2208 = vmatprep.subr.bf16.mxu0 0
      %2209 = vmatpush1.bf16.msra.mxu0 %v2139
      %2210 = vmatprep.subr.bf16.mxu0 0
      %2211 = vmatpush1.bf16.msra.mxu0 %v2138
      %2212 = vmatprep.subr.bf16.mxu0 0
      %2213 = vmatpush1.bf16.msra.mxu0 %v2137
      %2214 = vmatprep.subr.bf16.mxu0 0
      %2215 = vmatpush1.bf16.msra.mxu0 %v2136
      %2216 = vmatprep.subr.bf16.mxu0 0
      %2217 = vmatpush1.bf16.msra.mxu0 %v2135
      %2218 = vmatprep.subr.bf16.mxu0 0
      %2219 = vmatpush2.bf16.msra.mxu0 0
      %2220 = vmatprep.subr.bf16.mxu0 0
      %2221 = vmatpush2.bf16.msra.mxu0 0
      %2222 = vmatprep.subr.bf16.mxu0 0
      %2223 = vmatpush2.bf16.msra.mxu0 0
      %2224 = vmatprep.subr.bf16.mxu0 0
      %2225 = vmatpush2.bf16.msra.mxu0 0
      %2226 = vmatprep.subr.bf16.mxu0 0
      %2227 = vmatpush2.bf16.msra.mxu0 0
      %2228 = vmatprep.subr.bf16.mxu0 0
      %2229 = vmatpush2.bf16.msra.mxu0 0
      %2230 = vmatprep.subr.bf16.mxu0 0
      %2231 = vmatpush2.bf16.msra.mxu0 0
      %2232 = vmatprep.subr.bf16.mxu0 0
      %2233 = vmatpush2.bf16.msra.mxu0 %v2143
      %2234 = vmatprep.mubr.bf16.mxu0 %v2155
      %2235 = vmatmul.mubr.bf16.gmra.mxu0 %v2051
      %v2236 = vpop.f32.mrf.mxu0
      %v2237 = vadd.f32 %v1953, %v2236
      %v2238 = vpop.f32.mrf.mxu0
      %v2239 = vpop.f32.mrf.mxu0
      %v2240 = vadd.f32 %v1953, %v2239
      %v2241 = vpop.f32.mrf.mxu0
      %2242 = vmatprep.mubr.bf16.mxu0 %v2158
      %2243 = vmatmul.mubr.bf16.gmra.mxu0 %v2053
      %v2244 = vpop.f32.mrf.mxu0
      %v2245 = vadd.f32 %v1953, %v2244
      %v2246 = vpop.f32.mrf.mxu0
      %v2247 = vpop.f32.mrf.mxu0
      %v2248 = vadd.f32 %v1953, %v2247
      %v2249 = vpop.f32.mrf.mxu0
      %2250 = vmatprep.mubr.bf16.mxu0 %v2161
      %2251 = vmatmul.mubr.bf16.gmra.mxu0 %v2055
      %v2252 = vpop.f32.mrf.mxu0
      %v2253 = vadd.f32 %v1953, %v2252
      %v2254 = vpop.f32.mrf.mxu0
      %v2255 = vpop.f32.mrf.mxu0
      %v2256 = vadd.f32 %v1953, %v2255
      %v2257 = vpop.f32.mrf.mxu0
      %2258 = vmatprep.mubr.bf16.mxu0 %v2164
      %2259 = vmatmul.mubr.bf16.gmra.mxu0 %v2057
      %v2260 = vpop.f32.mrf.mxu0
      %v2261 = vadd.f32 %v1953, %v2260
      %v2262 = vpop.f32.mrf.mxu0
      %v2263 = vpop.f32.mrf.mxu0
      %v2264 = vadd.f32 %v1953, %v2263
      %v2265 = vpop.f32.mrf.mxu0
      %2266 = vmatprep.mubr.bf16.mxu0 %v2167
      %2267 = vmatmul.mubr.bf16.gmra.mxu0 %v2059
      %v2268 = vpop.f32.mrf.mxu0
      %v2269 = vadd.f32 %v1953, %v2268
      %v2270 = vpop.f32.mrf.mxu0
      %v2271 = vpop.f32.mrf.mxu0
      %v2272 = vadd.f32 %v1953, %v2271
      %v2273 = vpop.f32.mrf.mxu0
      %2274 = vmatprep.mubr.bf16.mxu0 %v2170
      %2275 = vmatmul.mubr.bf16.gmra.mxu0 %v2061
      %v2276 = vpop.f32.mrf.mxu0
      %v2277 = vadd.f32 %v1953, %v2276
      %v2278 = vpop.f32.mrf.mxu0
      %v2279 = vpop.f32.mrf.mxu0
      %v2280 = vadd.f32 %v1953, %v2279
      %v2281 = vpop.f32.mrf.mxu0
      %2282 = vmatprep.mubr.bf16.mxu0 %v2173
      %2283 = vmatmul.mubr.bf16.gmra.mxu0 %v2063
      %v2284 = vpop.f32.mrf.mxu0
      %v2285 = vadd.f32 %v1953, %v2284
      %v2286 = vpop.f32.mrf.mxu0
      %v2287 = vpop.f32.mrf.mxu0
      %v2288 = vadd.f32 %v1953, %v2287
      %v2289 = vpop.f32.mrf.mxu0
      %2290 = vmatprep.mubr.bf16.mxu0 %v2176
      %2291 = vmatmul.mubr.bf16.gmra.mxu0 %v2065
      %v2292 = vpop.f32.mrf.mxu0
      %v2293 = vadd.f32 %v1953, %v2292
      %v2294 = vpop.f32.mrf.mxu0
      %v2295 = vpop.f32.mrf.mxu0
      %v2296 = vadd.f32 %v1953, %v2295
      %v2297 = vpop.f32.mrf.mxu0
      %2298 = vmatprep.mubr.bf16.mxu0 %v2179
      %2299 = vmatmul.mubr.bf16.gmra.mxu0 %v2067
      %v2300 = vpop.f32.mrf.mxu0
      %v2301 = vadd.f32 %v1953, %v2300
      %v2302 = vpop.f32.mrf.mxu0
      %v2303 = vpop.f32.mrf.mxu0
      %v2304 = vadd.f32 %v1953, %v2303
      %v2305 = vpop.f32.mrf.mxu0
      %2306 = vmatprep.mubr.bf16.mxu0 %v2182
      %2307 = vmatmul.mubr.bf16.gmra.mxu0 %v2069
      %v2308 = vpop.f32.mrf.mxu0
      %v2309 = vadd.f32 %v1953, %v2308
      %v2310 = vpop.f32.mrf.mxu0
      %v2311 = vpop.f32.mrf.mxu0
      %v2312 = vadd.f32 %v1953, %v2311
      %v2313 = vpop.f32.mrf.mxu0
      %2314 = vmatprep.mubr.bf16.mxu0 %v2185
      %2315 = vmatmul.mubr.bf16.gmra.mxu0 %v2071
      %v2316 = vpop.f32.mrf.mxu0
      %v2317 = vadd.f32 %v1953, %v2316
      %v2318 = vpop.f32.mrf.mxu0
      %v2319 = vpop.f32.mrf.mxu0
      %v2320 = vadd.f32 %v1953, %v2319
      %v2321 = vpop.f32.mrf.mxu0
      %2322 = vmatprep.mubr.bf16.mxu0 %v2188
      %2323 = vmatmul.mubr.bf16.gmra.mxu0 %v2073
      %v2324 = vpop.f32.mrf.mxu0
      %v2325 = vadd.f32 %v1953, %v2324
      %v2326 = vpop.f32.mrf.mxu0
      %v2327 = vpop.f32.mrf.mxu0
      %v2328 = vadd.f32 %v1953, %v2327
      %v2329 = vpop.f32.mrf.mxu0
      %2330 = vmatprep.mubr.bf16.mxu0 %v2191
      %2331 = vmatmul.mubr.bf16.gmra.mxu0 %v2075
      %v2332 = vpop.f32.mrf.mxu0
      %v2333 = vadd.f32 %v1953, %v2332
      %v2334 = vpop.f32.mrf.mxu0
      %v2335 = vpop.f32.mrf.mxu0
      %v2336 = vadd.f32 %v1953, %v2335
      %v2337 = vpop.f32.mrf.mxu0
      %2338 = vmatprep.mubr.bf16.mxu0 %v2194
      %2339 = vmatmul.mubr.bf16.gmra.mxu0 %v2077
      %v2340 = vpop.f32.mrf.mxu0
      %v2341 = vadd.f32 %v1953, %v2340
      %v2342 = vpop.f32.mrf.mxu0
      %v2343 = vpop.f32.mrf.mxu0
      %v2344 = vadd.f32 %v1953, %v2343
      %v2345 = vpop.f32.mrf.mxu0
      %2346 = vmatprep.mubr.bf16.mxu0 %v2197
      %2347 = vmatmul.mubr.bf16.gmra.mxu0 %v2079
      %v2348 = vpop.f32.mrf.mxu0
      %v2349 = vadd.f32 %v1953, %v2348
      %v2350 = vpop.f32.mrf.mxu0
      %v2351 = vpop.f32.mrf.mxu0
      %v2352 = vadd.f32 %v1953, %v2351
      %v2353 = vpop.f32.mrf.mxu0
      %2354 = vmatprep.mubr.bf16.mxu0 %v2200
      %2355 = vmatmul.mubr.bf16.gmra.mxu0 %v2081
      %v2356 = vpop.f32.mrf.mxu0
      %v2357 = vadd.f32 %v1953, %v2356
      %v2358 = vpop.f32.mrf.mxu0
      %v2359 = vpop.f32.mrf.mxu0
      %v2360 = vadd.f32 %v1953, %v2359
      %v2361 = vpop.f32.mrf.mxu0
      %2362 = vdwg.mxu0
      %v2363 = vmax.f32 %v2237, 0.0
      %v2364 = vmax.f32 %v2240, 0.0
      %v2365 = vmax.f32 %v2245, 0.0
      %v2366 = vmax.f32 %v2248, 0.0
      %v2367 = vmax.f32 %v2253, 0.0
      %v2368 = vmax.f32 %v2256, 0.0
      %v2369 = vmax.f32 %v2261, 0.0
      %v2370 = vmax.f32 %v2264, 0.0
      %v2371 = vmax.f32 %v2269, 0.0
      %v2372 = vmax.f32 %v2272, 0.0
      %v2373 = vmax.f32 %v2277, 0.0
      %v2374 = vmax.f32 %v2280, 0.0
      %v2375 = vmax.f32 %v2285, 0.0
      %v2376 = vmax.f32 %v2288, 0.0
      %v2377 = vmax.f32 %v2293, 0.0
      %v2378 = vmax.f32 %v2296, 0.0
      %v2379 = vmax.f32 %v2301, 0.0
      %v2380 = vmax.f32 %v2304, 0.0
      %v2381 = vmax.f32 %v2309, 0.0
      %v2382 = vmax.f32 %v2312, 0.0
      %v2383 = vmax.f32 %v2317, 0.0
      %v2384 = vmax.f32 %v2320, 0.0
      %v2385 = vmax.f32 %v2325, 0.0
      %v2386 = vmax.f32 %v2328, 0.0
      %v2387 = vmax.f32 %v2333, 0.0
      %v2388 = vmax.f32 %v2336, 0.0
      %v2389 = vmax.f32 %v2341, 0.0
      %v2390 = vmax.f32 %v2344, 0.0
      %v2391 = vmax.f32 %v2349, 0.0
      %v2392 = vmax.f32 %v2352, 0.0
      %v2393 = vmax.f32 %v2357, 0.0
      %v2394 = vmax.f32 %v2360, 0.0
      %v2395 = vpack.c.bf16 %v2364, %v2363
      %v2396 = vpack.c.bf16 %v2366, %v2365
      %v2397 = vpack.c.bf16 %v2368, %v2367
      %v2398 = vpack.c.bf16 %v2370, %v2369
      %v2399 = vpack.c.bf16 %v2372, %v2371
      %v2400 = vpack.c.bf16 %v2374, %v2373
      %v2401 = vpack.c.bf16 %v2376, %v2375
      %v2402 = vpack.c.bf16 %v2378, %v2377
      %v2403 = vpack.c.bf16 %v2380, %v2379
      %v2404 = vpack.c.bf16 %v2382, %v2381
      %v2405 = vpack.c.bf16 %v2384, %v2383
      %v2406 = vpack.c.bf16 %v2386, %v2385
      %v2407 = vpack.c.bf16 %v2388, %v2387
      %v2408 = vpack.c.bf16 %v2390, %v2389
      %v2409 = vpack.c.bf16 %v2392, %v2391
      %v2410 = vpack.c.bf16 %v2394, %v2393
      %v2411 = vld [vmem:[%s3] sm:$0xf]
      %v2412 = vld [vmem:[%s3 + $0x4] sm:$0xf]
      %v2413 = vld [vmem:[%s3 + $0x8] sm:$0xf]
      %v2414 = vld [vmem:[%s4] sm:$0x1]
      %v2416 = vlaneseq
      %v2417 = vshrl.u32 %v2416, 7
      %v2418 = vsub.s32 0, %v2417
      %v2419 = vrot.slane %v2414, %v2418
      %v2424 = vunpack.c.l.b16 %v2411
      %v2425 = vunpack.c.l.b16 %v2412
      %v2426 = vunpack.c.l.b16 %v2413
      %v2427 = vpack.c.b16 %v2425, %v2424
      %v2428 = vpack.c.b16 %v2426, %v2426
      %vm2430 = vcmask 195584
      %v2432 = vsel %vm2430, %v2395, 0
      %v2435 = vsel %vm2430, %v2396, 0
      %v2438 = vsel %vm2430, %v2397, 0
      %v2441 = vsel %vm2430, %v2398, 0
      %v2444 = vsel %vm2430, %v2399, 0
      %v2447 = vsel %vm2430, %v2400, 0
      %v2450 = vsel %vm2430, %v2401, 0
      %v2453 = vsel %vm2430, %v2402, 0
      %v2456 = vsel %vm2430, %v2403, 0
      %v2459 = vsel %vm2430, %v2404, 0
      %v2462 = vsel %vm2430, %v2405, 0
      %v2465 = vsel %vm2430, %v2406, 0
      %v2468 = vsel %vm2430, %v2407, 0
      %v2471 = vsel %vm2430, %v2408, 0
      %v2474 = vsel %vm2430, %v2409, 0
      %v2477 = vsel %vm2430, %v2410, 0
      %vm2479 = vcmask 1043456
      %v2481 = vsel %vm2479, %v2428, 0
      %2483 = vmatprep.subr.bf16.mxu0 0
      %2484 = vmatpush1.bf16.msra.mxu0 0
      %2485 = vmatprep.subr.bf16.mxu0 0
      %2486 = vmatpush1.bf16.msra.mxu0 0
      %2487 = vmatprep.subr.bf16.mxu0 0
      %2488 = vmatpush1.bf16.msra.mxu0 0
      %2489 = vmatprep.subr.bf16.mxu0 0
      %2490 = vmatpush1.bf16.msra.mxu0 0
      %2491 = vmatprep.subr.bf16.mxu0 0
      %2492 = vmatpush1.bf16.msra.mxu0 0
      %2493 = vmatprep.subr.bf16.mxu0 0
      %2494 = vmatpush1.bf16.msra.mxu0 0
      %2495 = vmatprep.subr.bf16.mxu0 0
      %2496 = vmatpush1.bf16.msra.mxu0 %v2481
      %2497 = vmatprep.subr.bf16.mxu0 0
      %2498 = vmatpush1.bf16.msra.mxu0 %v2427
      %2499 = vmatprep.subr.bf16.mxu0 0
      %2500 = vmatpush2.bf16.msra.mxu0 0
      %2501 = vmatprep.subr.bf16.mxu0 0
      %2502 = vmatpush2.bf16.msra.mxu0 0
      %2503 = vmatprep.subr.bf16.mxu0 0
      %2504 = vmatpush2.bf16.msra.mxu0 0
      %2505 = vmatprep.subr.bf16.mxu0 0
      %2506 = vmatpush2.bf16.msra.mxu0 0
      %2507 = vmatprep.subr.bf16.mxu0 0
      %2508 = vmatpush2.bf16.msra.mxu0 0
      %2509 = vmatprep.subr.bf16.mxu0 0
      %2510 = vmatpush2.bf16.msra.mxu0 0
      %2511 = vmatprep.subr.bf16.mxu0 0
      %2512 = vmatpush2.bf16.msra.mxu0 0
      %2513 = vmatprep.subr.bf16.mxu0 0
      %2514 = vmatpush2.bf16.msra.mxu0 0
      %2515 = vmatprep.mubr.bf16.mxu0 0
      %2516 = vmatmul.mubr.bf16.gmra.mxu0 %v2432
      %v2517 = vpop.f32.mrf.mxu0
      %v2518 = vadd.f32 %v2419, %v2517
      %v2519 = vpop.f32.mrf.mxu0
      %v2520 = vpop.f32.mrf.mxu0
      %v2521 = vadd.f32 %v2419, %v2520
      %v2522 = vpop.f32.mrf.mxu0
      %2523 = vmatprep.mubr.bf16.mxu0 0
      %2524 = vmatmul.mubr.bf16.gmra.mxu0 %v2435
      %v2525 = vpop.f32.mrf.mxu0
      %v2526 = vadd.f32 %v2419, %v2525
      %v2527 = vpop.f32.mrf.mxu0
      %v2528 = vpop.f32.mrf.mxu0
      %v2529 = vadd.f32 %v2419, %v2528
      %v2530 = vpop.f32.mrf.mxu0
      %2531 = vmatprep.mubr.bf16.mxu0 0
      %2532 = vmatmul.mubr.bf16.gmra.mxu0 %v2438
      %v2533 = vpop.f32.mrf.mxu0
      %v2534 = vadd.f32 %v2419, %v2533
      %v2535 = vpop.f32.mrf.mxu0
      %v2536 = vpop.f32.mrf.mxu0
      %v2537 = vadd.f32 %v2419, %v2536
      %v2538 = vpop.f32.mrf.mxu0
      %2539 = vmatprep.mubr.bf16.mxu0 0
      %2540 = vmatmul.mubr.bf16.gmra.mxu0 %v2441
      %v2541 = vpop.f32.mrf.mxu0
      %v2542 = vadd.f32 %v2419, %v2541
      %v2543 = vpop.f32.mrf.mxu0
      %v2544 = vpop.f32.mrf.mxu0
      %v2545 = vadd.f32 %v2419, %v2544
      %v2546 = vpop.f32.mrf.mxu0
      %2547 = vmatprep.mubr.bf16.mxu0 0
      %2548 = vmatmul.mubr.bf16.gmra.mxu0 %v2444
      %v2549 = vpop.f32.mrf.mxu0
      %v2550 = vadd.f32 %v2419, %v2549
      %v2551 = vpop.f32.mrf.mxu0
      %v2552 = vpop.f32.mrf.mxu0
      %v2553 = vadd.f32 %v2419, %v2552
      %v2554 = vpop.f32.mrf.mxu0
      %2555 = vmatprep.mubr.bf16.mxu0 0
      %2556 = vmatmul.mubr.bf16.gmra.mxu0 %v2447
      %v2557 = vpop.f32.mrf.mxu0
      %v2558 = vadd.f32 %v2419, %v2557
      %v2559 = vpop.f32.mrf.mxu0
      %v2560 = vpop.f32.mrf.mxu0
      %v2561 = vadd.f32 %v2419, %v2560
      %v2562 = vpop.f32.mrf.mxu0
      %2563 = vmatprep.mubr.bf16.mxu0 0
      %2564 = vmatmul.mubr.bf16.gmra.mxu0 %v2450
      %v2565 = vpop.f32.mrf.mxu0
      %v2566 = vadd.f32 %v2419, %v2565
      %v2567 = vpop.f32.mrf.mxu0
      %v2568 = vpop.f32.mrf.mxu0
      %v2569 = vadd.f32 %v2419, %v2568
      %v2570 = vpop.f32.mrf.mxu0
      %2571 = vmatprep.mubr.bf16.mxu0 0
      %2572 = vmatmul.mubr.bf16.gmra.mxu0 %v2453
      %v2573 = vpop.f32.mrf.mxu0
      %v2574 = vadd.f32 %v2419, %v2573
      %v2575 = vpop.f32.mrf.mxu0
      %v2576 = vpop.f32.mrf.mxu0
      %v2577 = vadd.f32 %v2419, %v2576
      %v2578 = vpop.f32.mrf.mxu0
      %2579 = vmatprep.mubr.bf16.mxu0 0
      %2580 = vmatmul.mubr.bf16.gmra.mxu0 %v2456
      %v2581 = vpop.f32.mrf.mxu0
      %v2582 = vadd.f32 %v2419, %v2581
      %v2583 = vpop.f32.mrf.mxu0
      %v2584 = vpop.f32.mrf.mxu0
      %v2585 = vadd.f32 %v2419, %v2584
      %v2586 = vpop.f32.mrf.mxu0
      %2587 = vmatprep.mubr.bf16.mxu0 0
      %2588 = vmatmul.mubr.bf16.gmra.mxu0 %v2459
      %v2589 = vpop.f32.mrf.mxu0
      %v2590 = vadd.f32 %v2419, %v2589
      %v2591 = vpop.f32.mrf.mxu0
      %v2592 = vpop.f32.mrf.mxu0
      %v2593 = vadd.f32 %v2419, %v2592
      %v2594 = vpop.f32.mrf.mxu0
      %2595 = vmatprep.mubr.bf16.mxu0 0
      %2596 = vmatmul.mubr.bf16.gmra.mxu0 %v2462
      %v2597 = vpop.f32.mrf.mxu0
      %v2598 = vadd.f32 %v2419, %v2597
      %v2599 = vpop.f32.mrf.mxu0
      %v2600 = vpop.f32.mrf.mxu0
      %v2601 = vadd.f32 %v2419, %v2600
      %v2602 = vpop.f32.mrf.mxu0
      %2603 = vmatprep.mubr.bf16.mxu0 0
      %2604 = vmatmul.mubr.bf16.gmra.mxu0 %v2465
      %v2605 = vpop.f32.mrf.mxu0
      %v2606 = vadd.f32 %v2419, %v2605
      %v2607 = vpop.f32.mrf.mxu0
      %v2608 = vpop.f32.mrf.mxu0
      %v2609 = vadd.f32 %v2419, %v2608
      %v2610 = vpop.f32.mrf.mxu0
      %2611 = vmatprep.mubr.bf16.mxu0 0
      %2612 = vmatmul.mubr.bf16.gmra.mxu0 %v2468
      %v2613 = vpop.f32.mrf.mxu0
      %v2614 = vadd.f32 %v2419, %v2613
      %v2615 = vpop.f32.mrf.mxu0
      %v2616 = vpop.f32.mrf.mxu0
      %v2617 = vadd.f32 %v2419, %v2616
      %v2618 = vpop.f32.mrf.mxu0
      %2619 = vmatprep.mubr.bf16.mxu0 0
      %2620 = vmatmul.mubr.bf16.gmra.mxu0 %v2471
      %v2621 = vpop.f32.mrf.mxu0
      %v2622 = vadd.f32 %v2419, %v2621
      %v2623 = vpop.f32.mrf.mxu0
      %v2624 = vpop.f32.mrf.mxu0
      %v2625 = vadd.f32 %v2419, %v2624
      %v2626 = vpop.f32.mrf.mxu0
      %2627 = vmatprep.mubr.bf16.mxu0 0
      %2628 = vmatmul.mubr.bf16.gmra.mxu0 %v2474
      %v2629 = vpop.f32.mrf.mxu0
      %v2630 = vadd.f32 %v2419, %v2629
      %v2631 = vpop.f32.mrf.mxu0
      %v2632 = vpop.f32.mrf.mxu0
      %v2633 = vadd.f32 %v2419, %v2632
      %v2634 = vpop.f32.mrf.mxu0
      %2635 = vmatprep.mubr.bf16.mxu0 0
      %2636 = vmatmul.mubr.bf16.gmra.mxu0 %v2477
      %v2637 = vpop.f32.mrf.mxu0
      %v2638 = vadd.f32 %v2419, %v2637
      %v2639 = vpop.f32.mrf.mxu0
      %v2640 = vpop.f32.mrf.mxu0
      %v2641 = vadd.f32 %v2419, %v2640
      %v2642 = vpop.f32.mrf.mxu0
      %2643 = vdwg.mxu0
      %2644 = vst [vmem:[%s224] sm:$0xff] %v2518
      %2645 = vst [vmem:[%s224 + $0x8] sm:$0xff] %v2521
      %2646 = vst [vmem:[%s224 + $0x10] sm:$0xff] %v2526
      %2647 = vst [vmem:[%s224 + $0x18] sm:$0xff] %v2529
      %2648 = vst [vmem:[%s224 + $0x20] sm:$0xff] %v2534
      %2649 = vst [vmem:[%s224 + $0x28] sm:$0xff] %v2537
      %2650 = vst [vmem:[%s224 + $0x30] sm:$0xff] %v2542
      %2651 = vst [vmem:[%s224 + $0x38] sm:$0xff] %v2545
      %2652 = vst [vmem:[%s224 + $0x40] sm:$0xff] %v2550
      %2653 = vst [vmem:[%s224 + $0x48] sm:$0xff] %v2553
      %2654 = vst [vmem:[%s224 + $0x50] sm:$0xff] %v2558
      %2655 = vst [vmem:[%s224 + $0x58] sm:$0xff] %v2561
      %2656 = vst [vmem:[%s224 + $0x60] sm:$0xff] %v2566
      %2657 = vst [vmem:[%s224 + $0x68] sm:$0xff] %v2569
      %2658 = vst [vmem:[%s224 + $0x70] sm:$0xff] %v2574
      %2659 = vst [vmem:[%s224 + $0x78] sm:$0xff] %v2577
      %2660 = vst [vmem:[%s224 + $0x80] sm:$0xff] %v2582
      %2661 = vst [vmem:[%s224 + $0x88] sm:$0xff] %v2585
      %2662 = vst [vmem:[%s224 + $0x90] sm:$0xff] %v2590
      %2663 = vst [vmem:[%s224 + $0x98] sm:$0xff] %v2593
      %2664 = vst [vmem:[%s224 + $0xa0] sm:$0xff] %v2598
      %2665 = vst [vmem:[%s224 + $0xa8] sm:$0xff] %v2601
      %2666 = vst [vmem:[%s224 + $0xb0] sm:$0xff] %v2606
      %2667 = vst [vmem:[%s224 + $0xb8] sm:$0xff] %v2609
      %2668 = vst [vmem:[%s224 + $0xc0] sm:$0xff] %v2614
      %2669 = vst [vmem:[%s224 + $0xc8] sm:$0xff] %v2617
      %2670 = vst [vmem:[%s224 + $0xd0] sm:$0xff] %v2622
      %2671 = vst [vmem:[%s224 + $0xd8] sm:$0xff] %v2625
      %2672 = vst [vmem:[%s224 + $0xe0] sm:$0xff] %v2630
      %2673 = vst [vmem:[%s224 + $0xe8] sm:$0xff] %v2633
      %2674 = vst [vmem:[%s224 + $0xf0] sm:$0xff] %v2638
      %2675 = vst [vmem:[%s224 + $0xf8] sm:$0xff] %v2641
      %p2676 = scmp.lt.s32.totalorder %s16, 1
      %s2677 = scalar_select %p2676, %s16, 1
      %s2678 = smul.addr %s2677, 32
      %s2679 = smul.addr %s2678, 8
      %s2680 = scalar_lea.vmem %s5, %s2679
      // Predicated region
      $region41: #{forward.1} parent=39 // pred_check
        %p2681 = pneg %p144
      $region42: #{forward.1} parent=39 // pred_check_branch
        %2683 = sbr.rel (%p2681) target = $region44
      $region43: #{forward.1} parent=39 // pred_region
        _
      $region44: #{forward.1} parent=39 // pred_fallthru
        _
    $region40: #{forward.1} parent=5 // pred_fallthru
      _
    %p2684 = scmp.le.s32.totalorder 2, %s11
    // Predicated region
    $region45: #{forward.1} parent=5 // pred_check
      %p2685 = pneg %p2684
    $region46: #{forward.1} parent=5 // pred_check_branch
      %2687 = sbr.rel (%p2685) target = $region48
    $region47: #{forward.1} parent=5 // pred_region
      %s2688 = ssub.s32 %s11, 2
      // Predicated region
      $region49: #{forward.1} parent=47 // pred_check
        %p2689 = pneg %p150
      $region50: #{forward.1} parent=47 // pred_check_branch
        %2691 = sbr.rel (%p2689) target = $region52
      $region51: #{forward.1} parent=47 // pred_region
        %p2692 = scmp.lt.s32.totalorder %s17, 1
        %s2693 = scalar_select %p2692, %s17, 1
        %s2694 = smul.addr %s2693, 32
        %s2695 = smul.addr %s2694, 8
        %s2696 = scalar_lea.vmem %s5, %s2695
      $region52: #{forward.1} parent=47 // pred_fallthru
        _
    $region48: #{forward.1} parent=5 // pred_fallthru
      _
  $region6: #{forward.1} parent=0 // loop_footer
    %s15 = sadd.s32 1, %s11
  $region7: #{forward.1} parent=0 // loop_footer_branch
    %10 = sbr.rel target = $region3
  $region8: #{forward.1} parent=0 // loop_exit
    _

</llo_original>
